<compile_context>
chip_gen: v5e
topology: v5e:2x2
jax: 0.10.0
libtpu: 0.0.40
codegen_flags: <defaults>
</compile_context>

<pallas_src>
import functools

import jax
import jax.numpy as jnp
from jax.experimental import pallas as pl
from jax.experimental.pallas import tpu as pltpu

IMG_SIZE = 32
D = 16            # small stand-in for the default d=128 (keeps the test tiny)
LEAKY_SLOPE = 0.2
INIT_STD = 0.02   # normal_init(mean=0.0, std=0.02), biases zeroed

_VMEM_LIMIT = 48 * 1024 * 1024        # stays under v7x's 64 MiB physical VMEM
_RESIDENT_WEIGHT_BYTES = 8 * 1024 * 1024


def _round_up(x, m):
    return ((x + m - 1) // m) * m


# ----------------------------- Pallas kernels --------------------------------
def _mm_kernel_resident(a_ref, w_ref, b_ref, o_ref, *, leaky):
    """patches(TM,K_pad) @ W(K_pad,O_pad) + bias, fused LeakyReLU.  No K loop,
    no accumulator: weight/bias blocks are constant-indexed (VMEM resident)."""
    acc = jnp.dot(a_ref[...], w_ref[...], preferred_element_type=jnp.float32)
    acc = acc + b_ref[...]                       # (1, O_pad) f32, broadcast
    if leaky:
        acc = jnp.where(acc > 0, acc, LEAKY_SLOPE * acc)
    o_ref[...] = acc.astype(o_ref.dtype)


def _mm_kernel_kloop(a_ref, w_ref, b_ref, o_ref, acc_ref, *, leaky):
    """Fallback for large K: (M tiles, K tiles) grid with f32 VMEM accumulator,
    pl.when init/finalize along the K axis."""
    k = pl.program_id(1)

    @pl.when(k == 0)
    def _():
        acc_ref[...] = jnp.zeros_like(acc_ref)

    acc_ref[...] += jnp.dot(
        a_ref[...], w_ref[...], preferred_element_type=jnp.float32
    )

    @pl.when(k == pl.num_programs(1) - 1)
    def _():
        acc = acc_ref[...] + b_ref[...]
        if leaky:
            acc = jnp.where(acc > 0, acc, LEAKY_SLOPE * acc)
        o_ref[...] = acc.astype(o_ref.dtype)


def _head_kernel(a_ref, w_ref, o_ref):
    """O=1 head: VPU multiply + cross-lane reduce (avoids wasting 127/128 MXU
    columns and a 128x-padded writeback)."""
    a = a_ref[...].astype(jnp.float32)           # (M_pad, K_pad)
    w = w_ref[...].astype(jnp.float32)           # (1, K_pad) broadcast
    o_ref[...] = jnp.sum(a * w, axis=1, keepdims=True)


# --------------------------- matmul wrappers ----------------------------------
def matmul_bias_act(a, w2d, bias, leaky, out_dtype=jnp.bfloat16):
    """(M, K) @ (K, O) + bias, optional LeakyReLU(0.2). Returns (M, O)."""
    M, K = a.shape
    O = w2d.shape[1]

    O_pad = _round_up(O, 128)                    # lane-dense output stores
    K_pad = _round_up(K, 128)                    # bias kept out of K -> aligned

    # M tiling: multiples of 16 (bf16 sublane packing); >= 2 tiles when M is
    # large enough so the "parallel" axis can feed both v7x TensorCores.
    M16 = _round_up(M, 16)
    if M16 <= 64:
        TM = M16
    elif M16 <= 2048:
        TM = _round_up(M16 // 2, 16)
    else:
        TM = 1024
    M_pad = _round_up(M16, TM)

    a_p = jnp.pad(a.astype(jnp.bfloat16), ((0, M_pad - M), (0, K_pad - K)))
    w_p = jnp.pad(w2d.astype(jnp.bfloat16), ((0, K_pad - K), (0, O_pad - O)))
    b_p = jnp.pad(bias.astype(jnp.float32).reshape(1, O),
                  ((0, 0), (0, O_pad - O)))

    out_bytes = jnp.dtype(out_dtype).itemsize
    m_tiles = M_pad // TM

    if K_pad * O_pad * 2 <= _RESIDENT_WEIGHT_BYTES:
        # -------- resident-weight path: K grid collapsed, no accumulator -----
        grid = (m_tiles,)
        flops = 2 * M_pad * K_pad * O_pad
        bytes_accessed = (M_pad * K_pad * 2 + K_pad * O_pad * 2
                          + O_pad * 4 + M_pad * O_pad * out_bytes)
        out = pl.pallas_call(
            functools.partial(_mm_kernel_resident, leaky=leaky),
            out_shape=jax.ShapeDtypeStruct((M_pad, O_pad), out_dtype),
            grid_spec=pltpu.PrefetchScalarGridSpec(
                num_scalar_prefetch=0,
                grid=grid,
                in_specs=[
                    pl.BlockSpec((TM, K_pad), lambda i: (i, 0)),
                    pl.BlockSpec((K_pad, O_pad), lambda i: (0, 0)),   # resident
                    pl.BlockSpec((1, O_pad), lambda i: (0, 0)),       # resident
                ],
                out_specs=pl.BlockSpec((TM, O_pad), lambda i: (i, 0)),
            ),
            compiler_params=pltpu.CompilerParams(
                dimension_semantics=("parallel",),
                vmem_limit_bytes=_VMEM_LIMIT,
            ),
            cost_estimate=pl.CostEstimate(
                flops=flops, transcendentals=0, bytes_accessed=bytes_accessed),
        )(a_p, w_p, b_p)
    else:
        # -------- large-K fallback: (M, K) grid with f32 accumulator ---------
        TK = 512
        K_full = _round_up(K_pad, TK)
        a_p = jnp.pad(a_p, ((0, 0), (0, K_full - K_pad)))
        w_p = jnp.pad(w_p, ((0, K_full - K_pad), (0, 0)))
        grid = (m_tiles, K_full // TK)
        flops = 2 * M_pad * K_full * O_pad
        bytes_accessed = (M_pad * K_full * 2 + K_full * O_pad * 2 * m_tiles
                          + O_pad * 4 + M_pad * O_pad * out_bytes)
        out = pl.pallas_call(
            functools.partial(_mm_kernel_kloop, leaky=leaky),
            out_shape=jax.ShapeDtypeStruct((M_pad, O_pad), out_dtype),
            grid_spec=pltpu.PrefetchScalarGridSpec(
                num_scalar_prefetch=0,
                grid=grid,
                in_specs=[
                    pl.BlockSpec((TM, TK), lambda i, k: (i, k)),
                    pl.BlockSpec((TK, O_pad), lambda i, k: (k, 0)),
                    pl.BlockSpec((1, O_pad), lambda i, k: (0, 0)),
                ],
                out_specs=pl.BlockSpec((TM, O_pad), lambda i, k: (i, 0)),
                scratch_shapes=[pltpu.VMEM((TM, O_pad), jnp.float32)],
            ),
            compiler_params=pltpu.CompilerParams(
                dimension_semantics=("parallel", "arbitrary"),
                vmem_limit_bytes=_VMEM_LIMIT,
            ),
            cost_estimate=pl.CostEstimate(
                flops=flops, transcendentals=0, bytes_accessed=bytes_accessed),
        )(a_p, w_p, b_p)

    return out[:M, :O]


def head_matvec(a, w_vec):
    """(M, K) @ (K,) on the VPU (multiply + cross-lane reduce). Returns (M,1) f32."""
    M, K = a.shape
    K_pad = _round_up(K, 128)
    M_pad = _round_up(M, 16)
    a_p = jnp.pad(a.astype(jnp.bfloat16), ((0, M_pad - M), (0, K_pad - K)))
    w_p = jnp.pad(w_vec.astype(jnp.bfloat16).reshape(1, K),
                  ((0, 0), (0, K_pad - K)))
    out = pl.pallas_call(
        _head_kernel,
        out_shape=jax.ShapeDtypeStruct((M_pad, 1), jnp.float32),
        grid_spec=pltpu.PrefetchScalarGridSpec(
            num_scalar_prefetch=0,
            grid=(1,),
            in_specs=[
                pl.BlockSpec((M_pad, K_pad), lambda i: (0, 0)),
                pl.BlockSpec((1, K_pad), lambda i: (0, 0)),
            ],
            out_specs=pl.BlockSpec((M_pad, 1), lambda i: (0, 0)),
        ),
        compiler_params=pltpu.CompilerParams(
            dimension_semantics=("arbitrary",)),
    )(a_p, w_p)
    return out[:M]


# ------------------------------ conv wrapper ---------------------------------
def conv2d_nhwc(x, w_hwio, bias, stride, pad, leaky, out_dtype=jnp.bfloat16):
    """Conv2d on NHWC input with HWIO weights (matches torch.nn.Conv2d)."""
    B, H, W, C = x.shape
    KH, KW, _, O = w_hwio.shape
    xp = jnp.pad(x, ((0, 0), (pad, pad), (pad, pad), (0, 0)))
    OH = (H + 2 * pad - KH) // stride + 1
    OW = (W + 2 * pad - KW) // stride + 1

    # (kh, kw, c)-ordered patches; matches w_hwio.reshape(KH*KW*C, O).
    cols = [
        xp[:, kh:kh + stride * OH:stride, kw:kw + stride * OW:stride, :]
        for kh in range(KH)
        for kw in range(KW)
    ]
    patches = jnp.stack(cols, axis=3).reshape(B * OH * OW, KH * KW * C)
    w2d = w_hwio.reshape(KH * KW * C, O)

    out = matmul_bias_act(patches, w2d, bias, leaky, out_dtype)   # (B*OH*OW, O)
    return out.reshape(B, OH, OW, O)


# ------------------------------ parameters -----------------------------------
def init_params(key, d=D):
    def conv_w(k, o, c, ksize):
        return jax.random.normal(k, (o, c, ksize, ksize), jnp.float32) * INIT_STD

    k1, k2, k3, k4, k5 = jax.random.split(key, 5)
    return {
        "conv1_1": (conv_w(k1, d // 2, 1, 4), jnp.zeros((d // 2,), jnp.float32)),
        "conv1_2": (conv_w(k2, d // 2, 10, 4), jnp.zeros((d // 2,), jnp.float32)),
        "conv2":   (conv_w(k3, 2 * d, d, 4), jnp.zeros((2 * d,), jnp.float32)),
        "conv3":   (conv_w(k4, 4 * d, 2 * d, 4), jnp.zeros((4 * d,), jnp.float32)),
        "conv4":   (conv_w(k5, 1, 4 * d, 4), jnp.zeros((1,), jnp.float32)),
    }


def prepare_params(params):
    """OIHW -> HWIO, and fuse conv1_1 / conv1_2 into one block-diagonal conv."""
    def hwio(w):
        return jnp.transpose(w, (2, 3, 1, 0))

    w11, b11 = params["conv1_1"]          # (d/2, 1, 4, 4)
    w12, b12 = params["conv1_2"]          # (d/2, 10, 4, 4)
    d_half = w11.shape[0]
    # Input channel 0 = image, channels 1..10 = one-hot label maps.
    w1 = jnp.zeros((4, 4, 11, 2 * d_half), w11.dtype)
    w1 = w1.at[:, :, :1, :d_half].set(hwio(w11))
    w1 = w1.at[:, :, 1:, d_half:].set(hwio(w12))
    b1 = jnp.concatenate([b11, b12])

    w4, b4 = params["conv4"]              # (1, 4d, 4, 4)
    return {
        "conv1": (w1, b1),
        "conv2": (hwio(params["conv2"][0]), params["conv2"][1]),
        "conv3": (hwio(params["conv3"][0]), params["conv3"][1]),
        "conv4": (hwio(w4), b4),          # (4, 4, 4d, 1)
    }


def make_fill_nhwc():
    fill = jnp.zeros((10, 10, IMG_SIZE, IMG_SIZE), jnp.float32)
    fill = fill.at[jnp.arange(10), jnp.arange(10)].set(1.0)
    return fill.transpose(0, 2, 3, 1)                      # (10, 32, 32, 10)


# ------------------------------ forward pass ----------------------------------
def discriminator_forward(params, fill_nhwc, inp, output_nchw):
    B = output_nchw.shape[0]
    label_idx = inp[:, 0].astype(jnp.int32)                # label = input[:,0].long()

    x_img = output_nchw.transpose(0, 2, 3, 1)              # NCHW -> NHWC (once)
    label_maps = fill_nhwc[label_idx]                      # (B, 32, 32, 10)

    # Fused conv1: cat([conv1_1(image), conv1_2(label)], C) via one conv with a
    # block-diagonal weight over the channel-concatenated input (exact).
    x = jnp.concatenate([x_img, label_maps], axis=-1)      # (B, 32, 32, 11)
    w, b = params["conv1"]
    x = conv2d_nhwc(x, w, b, stride=2, pad=1, leaky=True)  # (B, 16, 16, d) bf16

    w, b = params["conv2"]
    x = conv2d_nhwc(x, w, b, stride=2, pad=1, leaky=True)  # (B, 8, 8, 2d)
    w, b = params["conv3"]
    x = conv2d_nhwc(x, w, b, stride=2, pad=1, leaky=True)  # (B, 4, 4, 4d)

    # conv4: 4x4 VALID conv, O=1, on a 4x4 map == mat-vec over the flattened
    # (kh, kw, c) patch (which is exactly x.reshape(B, 4*4*C)).
    w4, b4 = params["conv4"]                               # (4, 4, 4d, 1)
    a = x.reshape(B, 4 * 4 * x.shape[-1])
    out = head_matvec(a, w4.reshape(-1)) + b4.reshape(1, 1)
    return out.reshape(B, 1)


# ---------------------------------- main --------------------------------------
if __name__ == "__main__":
    key = jax.random.PRNGKey(0)
    k_params, k_lbl, k_img = jax.random.split(key, 3)

    B = 2
    params = prepare_params(init_params(k_params))
    fill_nhwc = make_fill_nhwc()

    # `input`: first column holds class labels (cast to long in torch)
    labels = jax.random.randint(k_lbl, (B, 1), 0, 10).astype(jnp.float32)
    # `output`: generated image batch, NCHW (B, 1, 32, 32)
    images = jax.random.normal(k_img, (B, 1, IMG_SIZE, IMG_SIZE), jnp.float32)

    fwd = jax.jit(discriminator_forward)
    out = fwd(params, fill_nhwc, labels, images)
    out = jax.block_until_ready(out)
    assert out.shape == (B, 1), out.shape
    print("KERNEL_OK")
</pallas_src>

<mosaic_0001>
module attributes {stable_mosaic.version = 11 : i64} {
  func.func @_mm_kernel_resident(%arg0: i32, %arg1: memref<256x256xbf16, #tpu.memory_space<vmem>>, %arg2: memref<256x128xbf16, #tpu.memory_space<vmem>>, %arg3: memref<1x128xf32, #tpu.memory_space<vmem>>, %arg4: memref<256x128xbf16, #tpu.memory_space<vmem>>) attributes {dimension_semantics = [#tpu.dimension_semantics<parallel>], iteration_bounds = array<i64: 2>, scalar_prefetch = 0 : i64, scratch_operands = 0 : i64, tpu.core_type = #tpu.core_type<tc>, window_params = [{transform_indices = @transform_0, window_bounds = array<i64: 256, 256>}, {pipeline_mode = #tpu.pipeline_mode<synchronous>, transform_indices = @transform_1, window_bounds = array<i64: 256, 128>}, {pipeline_mode = #tpu.pipeline_mode<synchronous>, transform_indices = @transform_2, window_bounds = array<i64: 1, 128>}, {transform_indices = @transform_3, window_bounds = array<i64: 256, 128>}]} {
    %c0 = arith.constant 0 : index
    %c0_0 = arith.constant 0 : index
    %0 = vector.load %arg1[%c0, %c0_0] : memref<256x256xbf16, #tpu.memory_space<vmem>>, vector<256x256xbf16>
    %c0_1 = arith.constant 0 : index
    %c0_2 = arith.constant 0 : index
    %1 = vector.load %arg2[%c0_1, %c0_2] : memref<256x128xbf16, #tpu.memory_space<vmem>>, vector<256x128xbf16>
    %cst = arith.constant dense<0.000000e+00> : vector<256x128xf32>
    %2 = tpu.matmul %0, %1, %cst {dimension_numbers = #tpu.dot_dimension_numbers<[1], [0], [0], [1], [0, 0, 1, 1], [], []>} : vector<256x256xbf16>, vector<256x128xbf16>, vector<256x128xf32> -> vector<256x128xf32>
    %c0_3 = arith.constant 0 : index
    %c0_4 = arith.constant 0 : index
    %3 = vector.load %arg3[%c0_3, %c0_4] : memref<1x128xf32, #tpu.memory_space<vmem>>, vector<1x128xf32>
    %4 = vector.broadcast %3 : vector<1x128xf32> to vector<256x128xf32>
    %5 = arith.addf %2, %4 : vector<256x128xf32>
    %cst_5 = arith.constant 0.000000e+00 : f32
    %6 = vector.broadcast %cst_5 : f32 to vector<256x128xf32>
    %7 = arith.cmpf ogt, %5, %6 : vector<256x128xf32>
    %cst_6 = arith.constant 2.000000e-01 : f32
    %8 = vector.broadcast %cst_6 : f32 to vector<256x128xf32>
    %9 = arith.mulf %8, %5 : vector<256x128xf32>
    %10 = arith.select %7, %5, %9 : vector<256x128xi1>, vector<256x128xf32>
    %11 = arith.truncf %10 : vector<256x128xf32> to vector<256x128xbf16>
    %c0_7 = arith.constant 0 : index
    %c0_8 = arith.constant 0 : index
    %12 = vector.load %arg4[%c0_7, %c0_8] : memref<256x128xbf16, #tpu.memory_space<vmem>>, vector<256x128xbf16>
    tpu.vector_store %arg4[%c0_7, %c0_8], %11 {strides = array<i32>} : memref<256x128xbf16, #tpu.memory_space<vmem>>, vector<256x128xbf16>,
    return
  }
  func.func @transform_0(%arg0: i32) -> (i32, i32) {
    %c0_i32 = arith.constant 0 : i32
    %c0_i32_0 = arith.constant 0 : i32
    return %arg0, %c0_i32 : i32, i32
  }
  func.func @transform_1(%arg0: i32) -> (i32, i32) {
    %c0_i32 = arith.constant 0 : i32
    %c0_i32_0 = arith.constant 0 : i32
    %c0_i32_1 = arith.constant 0 : i32
    return %c0_i32, %c0_i32_0 : i32, i32
  }
  func.func @transform_2(%arg0: i32) -> (i32, i32) {
    %c0_i32 = arith.constant 0 : i32
    %c0_i32_0 = arith.constant 0 : i32
    %c0_i32_1 = arith.constant 0 : i32
    return %c0_i32, %c0_i32_0 : i32, i32
  }
  func.func @transform_3(%arg0: i32) -> (i32, i32) {
    %c0_i32 = arith.constant 0 : i32
    %c0_i32_0 = arith.constant 0 : i32
    return %arg0, %c0_i32 : i32, i32
  }
}

module attributes {stable_mosaic.version = 11 : i64} {
  func.func @_mm_kernel_resident(%arg0: i32, %arg1: memref<64x256xbf16, #tpu.memory_space<vmem>>, %arg2: memref<256x128xbf16, #tpu.memory_space<vmem>>, %arg3: memref<1x128xf32, #tpu.memory_space<vmem>>, %arg4: memref<64x128xbf16, #tpu.memory_space<vmem>>) attributes {dimension_semantics = [#tpu.dimension_semantics<parallel>], iteration_bounds = array<i64: 2>, scalar_prefetch = 0 : i64, scratch_operands = 0 : i64, tpu.core_type = #tpu.core_type<tc>, window_params = [{transform_indices = @transform_0, window_bounds = array<i64: 64, 256>}, {pipeline_mode = #tpu.pipeline_mode<synchronous>, transform_indices = @transform_1, window_bounds = array<i64: 256, 128>}, {pipeline_mode = #tpu.pipeline_mode<synchronous>, transform_indices = @transform_2, window_bounds = array<i64: 1, 128>}, {transform_indices = @transform_3, window_bounds = array<i64: 64, 128>}]} {
    %c0 = arith.constant 0 : index
    %c0_0 = arith.constant 0 : index
    %0 = vector.load %arg1[%c0, %c0_0] : memref<64x256xbf16, #tpu.memory_space<vmem>>, vector<64x256xbf16>
    %c0_1 = arith.constant 0 : index
    %c0_2 = arith.constant 0 : index
    %1 = vector.load %arg2[%c0_1, %c0_2] : memref<256x128xbf16, #tpu.memory_space<vmem>>, vector<256x128xbf16>
    %cst = arith.constant dense<0.000000e+00> : vector<64x128xf32>
    %2 = tpu.matmul %0, %1, %cst {dimension_numbers = #tpu.dot_dimension_numbers<[1], [0], [0], [1], [0, 0, 1, 1], [], []>} : vector<64x256xbf16>, vector<256x128xbf16>, vector<64x128xf32> -> vector<64x128xf32>
    %c0_3 = arith.constant 0 : index
    %c0_4 = arith.constant 0 : index
    %3 = vector.load %arg3[%c0_3, %c0_4] : memref<1x128xf32, #tpu.memory_space<vmem>>, vector<1x128xf32>
    %4 = vector.broadcast %3 : vector<1x128xf32> to vector<64x128xf32>
    %5 = arith.addf %2, %4 : vector<64x128xf32>
    %cst_5 = arith.constant 0.000000e+00 : f32
    %6 = vector.broadcast %cst_5 : f32 to vector<64x128xf32>
    %7 = arith.cmpf ogt, %5, %6 : vector<64x128xf32>
    %cst_6 = arith.constant 2.000000e-01 : f32
    %8 = vector.broadcast %cst_6 : f32 to vector<64x128xf32>
    %9 = arith.mulf %8, %5 : vector<64x128xf32>
    %10 = arith.select %7, %5, %9 : vector<64x128xi1>, vector<64x128xf32>
    %11 = arith.truncf %10 : vector<64x128xf32> to vector<64x128xbf16>
    %c0_7 = arith.constant 0 : index
    %c0_8 = arith.constant 0 : index
    %12 = vector.load %arg4[%c0_7, %c0_8] : memref<64x128xbf16, #tpu.memory_space<vmem>>, vector<64x128xbf16>
    tpu.vector_store %arg4[%c0_7, %c0_8], %11 {strides = array<i32>} : memref<64x128xbf16, #tpu.memory_space<vmem>>, vector<64x128xbf16>,
    return
  }
  func.func @transform_0(%arg0: i32) -> (i32, i32) {
    %c0_i32 = arith.constant 0 : i32
    %c0_i32_0 = arith.constant 0 : i32
    return %arg0, %c0_i32 : i32, i32
  }
  func.func @transform_1(%arg0: i32) -> (i32, i32) {
    %c0_i32 = arith.constant 0 : i32
    %c0_i32_0 = arith.constant 0 : i32
    %c0_i32_1 = arith.constant 0 : i32
    return %c0_i32, %c0_i32_0 : i32, i32
  }
  func.func @transform_2(%arg0: i32) -> (i32, i32) {
    %c0_i32 = arith.constant 0 : i32
    %c0_i32_0 = arith.constant 0 : i32
    %c0_i32_1 = arith.constant 0 : i32
    return %c0_i32, %c0_i32_0 : i32, i32
  }
  func.func @transform_3(%arg0: i32) -> (i32, i32) {
    %c0_i32 = arith.constant 0 : i32
    %c0_i32_0 = arith.constant 0 : i32
    return %arg0, %c0_i32 : i32, i32
  }
}

module attributes {stable_mosaic.version = 11 : i64} {
  func.func @_mm_kernel_resident(%arg0: i32, %arg1: memref<32x512xbf16, #tpu.memory_space<vmem>>, %arg2: memref<512x128xbf16, #tpu.memory_space<vmem>>, %arg3: memref<1x128xf32, #tpu.memory_space<vmem>>, %arg4: memref<32x128xbf16, #tpu.memory_space<vmem>>) attributes {dimension_semantics = [#tpu.dimension_semantics<parallel>], iteration_bounds = array<i64: 1>, scalar_prefetch = 0 : i64, scratch_operands = 0 : i64, tpu.core_type = #tpu.core_type<tc>, window_params = [{transform_indices = @transform_0, window_bounds = array<i64: 32, 512>}, {pipeline_mode = #tpu.pipeline_mode<synchronous>, transform_indices = @transform_1, window_bounds = array<i64: 512, 128>}, {pipeline_mode = #tpu.pipeline_mode<synchronous>, transform_indices = @transform_2, window_bounds = array<i64: 1, 128>}, {transform_indices = @transform_3, window_bounds = array<i64: 32, 128>}]} {
    %c0 = arith.constant 0 : index
    %c0_0 = arith.constant 0 : index
    %0 = vector.load %arg1[%c0, %c0_0] : memref<32x512xbf16, #tpu.memory_space<vmem>>, vector<32x512xbf16>
    %c0_1 = arith.constant 0 : index
    %c0_2 = arith.constant 0 : index
    %1 = vector.load %arg2[%c0_1, %c0_2] : memref<512x128xbf16, #tpu.memory_space<vmem>>, vector<512x128xbf16>
    %cst = arith.constant dense<0.000000e+00> : vector<32x128xf32>
    %2 = tpu.matmul %0, %1, %cst {dimension_numbers = #tpu.dot_dimension_numbers<[1], [0], [0], [1], [0, 0, 1, 1], [], []>} : vector<32x512xbf16>, vector<512x128xbf16>, vector<32x128xf32> -> vector<32x128xf32>
    %c0_3 = arith.constant 0 : index
    %c0_4 = arith.constant 0 : index
    %3 = vector.load %arg3[%c0_3, %c0_4] : memref<1x128xf32, #tpu.memory_space<vmem>>, vector<1x128xf32>
    %4 = vector.broadcast %3 : vector<1x128xf32> to vector<32x128xf32>
    %5 = arith.addf %2, %4 : vector<32x128xf32>
    %cst_5 = arith.constant 0.000000e+00 : f32
    %6 = vector.broadcast %cst_5 : f32 to vector<32x128xf32>
    %7 = arith.cmpf ogt, %5, %6 : vector<32x128xf32>
    %cst_6 = arith.constant 2.000000e-01 : f32
    %8 = vector.broadcast %cst_6 : f32 to vector<32x128xf32>
    %9 = arith.mulf %8, %5 : vector<32x128xf32>
    %10 = arith.select %7, %5, %9 : vector<32x128xi1>, vector<32x128xf32>
    %11 = arith.truncf %10 : vector<32x128xf32> to vector<32x128xbf16>
    %c0_7 = arith.constant 0 : index
    %c0_8 = arith.constant 0 : index
    %12 = vector.load %arg4[%c0_7, %c0_8] : memref<32x128xbf16, #tpu.memory_space<vmem>>, vector<32x128xbf16>
    tpu.vector_store %arg4[%c0_7, %c0_8], %11 {strides = array<i32>} : memref<32x128xbf16, #tpu.memory_space<vmem>>, vector<32x128xbf16>,
    return
  }
  func.func @transform_0(%arg0: i32) -> (i32, i32) {
    %c0_i32 = arith.constant 0 : i32
    %c0_i32_0 = arith.constant 0 : i32
    return %arg0, %c0_i32 : i32, i32
  }
  func.func @transform_1(%arg0: i32) -> (i32, i32) {
    %c0_i32 = arith.constant 0 : i32
    %c0_i32_0 = arith.constant 0 : i32
    %c0_i32_1 = arith.constant 0 : i32
    return %c0_i32, %c0_i32_0 : i32, i32
  }
  func.func @transform_2(%arg0: i32) -> (i32, i32) {
    %c0_i32 = arith.constant 0 : i32
    %c0_i32_0 = arith.constant 0 : i32
    %c0_i32_1 = arith.constant 0 : i32
    return %c0_i32, %c0_i32_0 : i32, i32
  }
  func.func @transform_3(%arg0: i32) -> (i32, i32) {
    %c0_i32 = arith.constant 0 : i32
    %c0_i32_0 = arith.constant 0 : i32
    return %arg0, %c0_i32 : i32, i32
  }
}

module attributes {stable_mosaic.version = 11 : i64} {
  func.func @_head_kernel(%arg0: i32, %arg1: memref<16x1024xbf16, #tpu.memory_space<vmem>>, %arg2: memref<1x1024xbf16, #tpu.memory_space<vmem>>, %arg3: memref<16x1xf32, #tpu.memory_space<vmem>>) attributes {dimension_semantics = [#tpu.dimension_semantics<arbitrary>], iteration_bounds = array<i64: 1>, scalar_prefetch = 0 : i64, scratch_operands = 0 : i64, tpu.core_type = #tpu.core_type<tc>, window_params = [{pipeline_mode = #tpu.pipeline_mode<synchronous>, transform_indices = @transform_0, window_bounds = array<i64: 16, 1024>}, {pipeline_mode = #tpu.pipeline_mode<synchronous>, transform_indices = @transform_1, window_bounds = array<i64: 1, 1024>}, {pipeline_mode = #tpu.pipeline_mode<synchronous>, transform_indices = @transform_2, window_bounds = array<i64: 16, 1>}]} {
    %c0 = arith.constant 0 : index
    %c0_0 = arith.constant 0 : index
    %0 = vector.load %arg1[%c0, %c0_0] : memref<16x1024xbf16, #tpu.memory_space<vmem>>, vector<16x1024xbf16>
    %1 = arith.extf %0 : vector<16x1024xbf16> to vector<16x1024xf32>
    %c0_1 = arith.constant 0 : index
    %c0_2 = arith.constant 0 : index
    %2 = vector.load %arg2[%c0_1, %c0_2] : memref<1x1024xbf16, #tpu.memory_space<vmem>>, vector<1x1024xbf16>
    %3 = arith.extf %2 : vector<1x1024xbf16> to vector<1x1024xf32>
    %4 = vector.broadcast %3 : vector<1x1024xf32> to vector<16x1024xf32>
    %5 = arith.mulf %1, %4 : vector<16x1024xf32>
    %cst = arith.constant dense<0.000000e+00> : vector<16xf32>
    %6 = vector.multi_reduction <add>, %5, %cst [1] : vector<16x1024xf32> to vector<16xf32>
    %7 = vector.shape_cast %6 : vector<16xf32> to vector<16x1xf32>
    %c0_3 = arith.constant 0 : index
    %c0_4 = arith.constant 0 : index
    %8 = vector.load %arg3[%c0_3, %c0_4] : memref<16x1xf32, #tpu.memory_space<vmem>>, vector<16x1xf32>
    tpu.vector_store %arg3[%c0_3, %c0_4], %7 {strides = array<i32>} : memref<16x1xf32, #tpu.memory_space<vmem>>, vector<16x1xf32>,
    return
  }
  func.func @transform_0(%arg0: i32) -> (i32, i32) {
    %c0_i32 = arith.constant 0 : i32
    %c0_i32_0 = arith.constant 0 : i32
    %c0_i32_1 = arith.constant 0 : i32
    return %c0_i32, %c0_i32_0 : i32, i32
  }
  func.func @transform_1(%arg0: i32) -> (i32, i32) {
    %c0_i32 = arith.constant 0 : i32
    %c0_i32_0 = arith.constant 0 : i32
    %c0_i32_1 = arith.constant 0 : i32
    return %c0_i32, %c0_i32_0 : i32, i32
  }
  func.func @transform_2(%arg0: i32) -> (i32, i32) {
    %c0_i32 = arith.constant 0 : i32
    %c0_i32_0 = arith.constant 0 : i32
    %c0_i32_1 = arith.constant 0 : i32
    return %c0_i32, %c0_i32_0 : i32, i32
  }
}

</mosaic_0001>

<llo_original>
// kernel: discriminator_forward.4
$region0: #{discriminator_forward.4}
  #allocation0 [shape = 'u32[]', space=smem, size = 0x4, offset = 0x4, fixed_abs, tag = 'smem constant byte address 0x4 - core index']
  #allocation1 [shape = 'u32[72,128]{1,0:T(1,128)}', space=vmem, size = 0x9000, scoped, tag = 'internal scratch']
  %s0 = inlined_call_operand.vmem [shape: bf16[512,256], index: 0, kind: input, shape index: {}]
  %s1 = inlined_call_operand.vmem [shape: bf16[256,128], index: 1, kind: input, shape index: {}]
  %s2 = inlined_call_operand.vmem [shape: f32[1,128], index: 2, kind: input, shape index: {}]
  %s3 = inlined_call_operand.vmem [shape: bf16[512,128], index: 3, kind: output, shape index: {}]
  %s4 = sld [smem:[#allocation0]]
  $region45: #{discriminator_forward.4} parent=0
    _
  %s6 = ssub.s32 1, %s4
  %s7 = scalar_select 0, %s6, %s4
  loop: start=0, step=1, limit=4
  $region2: #{discriminator_forward.4} parent=0 // loop_pre_header
    _
  $region3: #{discriminator_forward.4} parent=0 // loop_header
    %s9 = sphi 0, %s13
    %p10 = scmp.ge.s32.totalorder %s9, 4
    %s19 = sphi 0, %s21
    %s22 = sphi 0, %s19
    %s23 = sphi 0, %s22
    %s39 = sphi 0, %s23
    %s43 = sphi 0, %s43
    %s45 = sphi 0, %s43
    %s46 = sphi 0, %s45
    %s60 = sphi 0, %s46
    %s64 = sphi 0, %s64
    %s66 = sphi 0, %s64
    %s67 = sphi 0, %s66
    %s81 = sphi 0, %s67
    %s87 = sphi 0, %s89
    %s90 = sphi 0, %s87
    %s91 = sphi 0, %s90
    %s107 = sphi 0, %s91
  $region4: #{discriminator_forward.4} parent=0 // loop_header_branch
    %12 = sbr.rel (%p10) target = $region8
  $region5: #{discriminator_forward.4} parent=0 // loop_body
    %s14 = ssub.s32 %s9, 1
    %s15 = ssub.s32 %s9, 2
    %s16 = sadd.s32 %s9, 1
    %s17 = ssub.s32 %s9, %s16
    %p18 = scmp.eq.s32.totalorder %s17, 0
    %s20 = sadd.s32 %s19, 1
    %s21 = scalar_select %p18, %s19, %s20
    %p24 = pneg %p18
    %p25 = scmp.eq.s32.totalorder %s9, 1
    %p26 = por %p24, %p25
    %p27 = scmp.ne.s32.totalorder %s19, %s22
    %p28 = scmp.eq.s32.totalorder %s9, 0
    %p29 = por %p27, %p28
    %p30 = scmp.ne.s32.totalorder %s19, %s22
    %p31 = scmp.eq.s32.totalorder %s14, 1
    %p32 = por %p30, %p31
    %p33 = scmp.ne.s32.totalorder %s22, %s23
    %p34 = scmp.eq.s32.totalorder %s14, 0
    %p35 = por %p33, %p34
    %p36 = scmp.ne.s32.totalorder %s22, %s23
    %p37 = scmp.eq.s32.totalorder %s15, 1
    %p38 = por %p36, %p37
    %p40 = scmp.ne.s32.totalorder %s23, %s39
    %p41 = scmp.eq.s32.totalorder %s15, 0
    %p42 = por %p40, %p41
    %s44 = sadd.s32 %s43, 1
    %p47 = scmp.eq.s32.totalorder %s9, 1
    %p48 = scmp.ne.s32.totalorder %s43, %s45
    %p49 = scmp.eq.s32.totalorder %s9, 0
    %p50 = por %p48, %p49
    %p51 = scmp.ne.s32.totalorder %s43, %s45
    %p52 = scmp.eq.s32.totalorder %s14, 1
    %p53 = por %p51, %p52
    %p54 = scmp.ne.s32.totalorder %s45, %s46
    %p55 = scmp.eq.s32.totalorder %s14, 0
    %p56 = por %p54, %p55
    %p57 = scmp.ne.s32.totalorder %s45, %s46
    %p58 = scmp.eq.s32.totalorder %s15, 1
    %p59 = por %p57, %p58
    %p61 = scmp.ne.s32.totalorder %s46, %s60
    %p62 = scmp.eq.s32.totalorder %s15, 0
    %p63 = por %p61, %p62
    %s65 = sadd.s32 %s64, 1
    %p68 = scmp.eq.s32.totalorder %s9, 1
    %p69 = scmp.ne.s32.totalorder %s64, %s66
    %p70 = scmp.eq.s32.totalorder %s9, 0
    %p71 = por %p69, %p70
    %p72 = scmp.ne.s32.totalorder %s64, %s66
    %p73 = scmp.eq.s32.totalorder %s14, 1
    %p74 = por %p72, %p73
    %p75 = scmp.ne.s32.totalorder %s66, %s67
    %p76 = scmp.eq.s32.totalorder %s14, 0
    %p77 = por %p75, %p76
    %p78 = scmp.ne.s32.totalorder %s66, %s67
    %p79 = scmp.eq.s32.totalorder %s15, 1
    %p80 = por %p78, %p79
    %p82 = scmp.ne.s32.totalorder %s67, %s81
    %p83 = scmp.eq.s32.totalorder %s15, 0
    %p84 = por %p82, %p83
    %s85 = ssub.s32 %s9, %s16
    %p86 = scmp.eq.s32.totalorder %s85, 0
    %s88 = sadd.s32 %s87, 1
    %s89 = scalar_select %p86, %s87, %s88
    %p92 = pneg %p86
    %p93 = scmp.eq.s32.totalorder %s9, 1
    %p94 = por %p92, %p93
    %p95 = scmp.ne.s32.totalorder %s87, %s90
    %p96 = scmp.eq.s32.totalorder %s9, 0
    %p97 = por %p95, %p96
    %p98 = scmp.ne.s32.totalorder %s87, %s90
    %p99 = scmp.eq.s32.totalorder %s14, 1
    %p100 = por %p98, %p99
    %p101 = scmp.ne.s32.totalorder %s90, %s91
    %p102 = scmp.eq.s32.totalorder %s14, 0
    %p103 = por %p101, %p102
    %p104 = scmp.ne.s32.totalorder %s90, %s91
    %p105 = scmp.eq.s32.totalorder %s15, 1
    %p106 = por %p104, %p105
    %p108 = scmp.ne.s32.totalorder %s91, %s107
    %p109 = scmp.eq.s32.totalorder %s15, 0
    %p110 = por %p108, %p109
    %p111 = scmp.le.s32.totalorder 1, %s9
    %p112 = scmp.lt.s32.totalorder %s9, 3
    %p113 = pnand %p111, %p112
    %p114 = pneg %p113
    // Predicated region
    $region9: #{discriminator_forward.4} parent=5 // pred_check
      _
    $region10: #{discriminator_forward.4} parent=5 // pred_check_branch
      %116 = sbr.rel (%p113) target = $region12
    $region11: #{discriminator_forward.4} parent=5 // pred_region
      %s117 = ssub.s32 %s9, 1
      // Predicated region
      $region13: #{discriminator_forward.4} parent=11 // pred_check
        %p118 = pneg %p56
      $region14: #{discriminator_forward.4} parent=11 // pred_check_branch
        %120 = sbr.rel (%p118) target = $region16
      $region15: #{discriminator_forward.4} parent=11 // pred_region
        _
      $region16: #{discriminator_forward.4} parent=11 // pred_fallthru
        _
      // Predicated region
      $region17: #{discriminator_forward.4} parent=11 // pred_check
        %p121 = pneg %p77
      $region18: #{discriminator_forward.4} parent=11 // pred_check_branch
        %123 = sbr.rel (%p121) target = $region20
      $region19: #{discriminator_forward.4} parent=11 // pred_region
        _
      $region20: #{discriminator_forward.4} parent=11 // pred_fallthru
        _
    $region12: #{discriminator_forward.4} parent=5 // pred_fallthru
      _
    %p124 = scmp.lt.s32.totalorder %s9, 2
    // Predicated region
    $region21: #{discriminator_forward.4} parent=5 // pred_check
      %p125 = pneg %p124
    $region22: #{discriminator_forward.4} parent=5 // pred_check_branch
      %127 = sbr.rel (%p125) target = $region24
    $region23: #{discriminator_forward.4} parent=5 // pred_region
      // Predicated region
      $region25: #{discriminator_forward.4} parent=23 // pred_check
        %p128 = pneg %p29
      $region26: #{discriminator_forward.4} parent=23 // pred_check_branch
        %130 = sbr.rel (%p128) target = $region28
      $region27: #{discriminator_forward.4} parent=23 // pred_region
        %s131 = smul.u32 32, %s9
        %p132 = scmp.lt.s32.totalorder %s131, 63
        %s133 = scalar_select %p132, %s131, 63
        %s134 = smul.addr %s133, 2
        %s135 = smul.addr %s134, 4
        %s136 = scalar_lea.vmem %s0, %s135
        %s137 = smul.u32 32, %s9
      $region28: #{discriminator_forward.4} parent=23 // pred_fallthru
        _
    $region24: #{discriminator_forward.4} parent=5 // pred_fallthru
      _
    %p138 = scmp.le.s32.totalorder 1, %s9
    %p139 = scmp.lt.s32.totalorder %s9, 3
    %p140 = pnand %p138, %p139
    %p141 = pneg %p140
    // Predicated region
    $region29: #{discriminator_forward.4} parent=5 // pred_check
      _
    $region30: #{discriminator_forward.4} parent=5 // pred_check_branch
      %143 = sbr.rel (%p140) target = $region32
    $region31: #{discriminator_forward.4} parent=5 // pred_region
      %s144 = ssub.s32 %s9, 1
      %s145 = smul.u32 32, %s14
      %p146 = scmp.lt.s32.totalorder %s145, 63
      %s147 = scalar_select %p146, %s145, 63
      %s148 = smul.addr %s147, 2
      %s149 = smul.addr %s148, 4
      %s150 = scalar_lea.vmem %s0, %s149
      %p151 = pneg %p35
      %p152 = pneg %p32
      %p153 = pneg %p56
      %p154 = pneg %p53
      %p155 = pneg %p77
      %p156 = pneg %p74
      %p157 = pneg %p103
      %p158 = pneg %p100
      %s159 = smul.u32 32, %s14
      %p160 = scmp.lt.s32.totalorder %s159, 63
      %s161 = scalar_select %p160, %s159, 63
      %s162 = smul.addr %s161, 4
      %s163 = scalar_lea.vmem %s3, %s162
      %s164 = smul.u32 32, %s14
      %p165 = scmp.lt.s32.totalorder %s164, 63
      %s166 = scalar_select %p165, %s164, 63
      %s167 = smul.addr %s166, 2
      %s168 = smul.addr %s167, 4
      %s169 = scalar_lea.vmem %s0, %s168
      %s170 = smul.u32 32, %s14
      %s171 = smul.u32 32, %s14
      %p172 = scmp.lt.s32.totalorder %s171, 63
      %s173 = scalar_select %p172, %s171, 63
      %s174 = smul.addr %s173, 4
      %s175 = scalar_lea.vmem %s3, %s174
      %s176 = smul.u32 32, %s14
      %v177 = vld [vmem:[%s169] sm:$0xff]
      %v178 = vld [vmem:[%s169 + $0x8] sm:$0xff]
      %v179 = vld [vmem:[%s169 + $0x10] sm:$0xff]
      %v180 = vld [vmem:[%s169 + $0x18] sm:$0xff]
      %v181 = vld [vmem:[%s169 + $0x20] sm:$0xff]
      %v182 = vld [vmem:[%s169 + $0x28] sm:$0xff]
      %v183 = vld [vmem:[%s169 + $0x30] sm:$0xff]
      %v184 = vld [vmem:[%s169 + $0x38] sm:$0xff]
      %v185 = vld [vmem:[%s169 + $0x40] sm:$0xff]
      %v186 = vld [vmem:[%s169 + $0x48] sm:$0xff]
      %v187 = vld [vmem:[%s169 + $0x50] sm:$0xff]
      %v188 = vld [vmem:[%s169 + $0x58] sm:$0xff]
      %v189 = vld [vmem:[%s169 + $0x60] sm:$0xff]
      %v190 = vld [vmem:[%s169 + $0x68] sm:$0xff]
      %v191 = vld [vmem:[%s169 + $0x70] sm:$0xff]
      %v192 = vld [vmem:[%s169 + $0x78] sm:$0xff]
      %v193 = vld [vmem:[%s169 + $0x80] sm:$0xff]
      %v194 = vld [vmem:[%s169 + $0x88] sm:$0xff]
      %v195 = vld [vmem:[%s169 + $0x90] sm:$0xff]
      %v196 = vld [vmem:[%s169 + $0x98] sm:$0xff]
      %v197 = vld [vmem:[%s169 + $0xa0] sm:$0xff]
      %v198 = vld [vmem:[%s169 + $0xa8] sm:$0xff]
      %v199 = vld [vmem:[%s169 + $0xb0] sm:$0xff]
      %v200 = vld [vmem:[%s169 + $0xb8] sm:$0xff]
      %v201 = vld [vmem:[%s169 + $0xc0] sm:$0xff]
      %v202 = vld [vmem:[%s169 + $0xc8] sm:$0xff]
      %v203 = vld [vmem:[%s169 + $0xd0] sm:$0xff]
      %v204 = vld [vmem:[%s169 + $0xd8] sm:$0xff]
      %v205 = vld [vmem:[%s169 + $0xe0] sm:$0xff]
      %v206 = vld [vmem:[%s169 + $0xe8] sm:$0xff]
      %v207 = vld [vmem:[%s169 + $0xf0] sm:$0xff]
      %v208 = vld [vmem:[%s169 + $0xf8] sm:$0xff]
      %v209 = vld [vmem:[%s1] sm:$0xf]
      %v210 = vld [vmem:[%s1 + $0x4] sm:$0xf]
      %v211 = vld [vmem:[%s1 + $0x8] sm:$0xf]
      %v212 = vld [vmem:[%s1 + $0xc] sm:$0xf]
      %v213 = vld [vmem:[%s1 + $0x10] sm:$0xf]
      %v214 = vld [vmem:[%s1 + $0x14] sm:$0xf]
      %v215 = vld [vmem:[%s1 + $0x18] sm:$0xf]
      %v216 = vld [vmem:[%s1 + $0x1c] sm:$0xf]
      %v217 = vld [vmem:[%s1 + $0x20] sm:$0xf]
      %v218 = vld [vmem:[%s1 + $0x24] sm:$0xf]
      %v219 = vld [vmem:[%s1 + $0x28] sm:$0xf]
      %v220 = vld [vmem:[%s1 + $0x2c] sm:$0xf]
      %v221 = vld [vmem:[%s1 + $0x30] sm:$0xf]
      %v222 = vld [vmem:[%s1 + $0x34] sm:$0xf]
      %v223 = vld [vmem:[%s1 + $0x38] sm:$0xf]
      %v224 = vld [vmem:[%s1 + $0x3c] sm:$0xf]
      %v225 = vld [vmem:[%s1 + $0x40] sm:$0xf]
      %v226 = vld [vmem:[%s1 + $0x44] sm:$0xf]
      %v227 = vld [vmem:[%s1 + $0x48] sm:$0xf]
      %v228 = vld [vmem:[%s1 + $0x4c] sm:$0xf]
      %v229 = vld [vmem:[%s1 + $0x50] sm:$0xf]
      %v230 = vld [vmem:[%s1 + $0x54] sm:$0xf]
      %v231 = vld [vmem:[%s1 + $0x58] sm:$0xf]
      %v232 = vld [vmem:[%s1 + $0x5c] sm:$0xf]
      %v233 = vld [vmem:[%s1 + $0x60] sm:$0xf]
      %v234 = vld [vmem:[%s1 + $0x64] sm:$0xf]
      %v235 = vld [vmem:[%s1 + $0x68] sm:$0xf]
      %v236 = vld [vmem:[%s1 + $0x6c] sm:$0xf]
      %v237 = vld [vmem:[%s1 + $0x70] sm:$0xf]
      %v238 = vld [vmem:[%s1 + $0x74] sm:$0xf]
      %v239 = vld [vmem:[%s1 + $0x78] sm:$0xf]
      %v240 = vld [vmem:[%s1 + $0x7c] sm:$0xf]
      %v241 = vld [vmem:[%s2] sm:$0x1]
      %v243 = vperm.slane %v241, 0
      %v277 = vunpack.c.l.b16 %v177
      %v278 = vunpack.c.h.b16 %v177
      %v279 = vunpack.c.l.b16 %v178
      %v280 = vunpack.c.h.b16 %v178
      %v281 = vunpack.c.l.b16 %v179
      %v282 = vunpack.c.h.b16 %v179
      %v283 = vunpack.c.l.b16 %v180
      %v284 = vunpack.c.h.b16 %v180
      %v285 = vunpack.c.l.b16 %v181
      %v286 = vunpack.c.h.b16 %v181
      %v287 = vunpack.c.l.b16 %v182
      %v288 = vunpack.c.h.b16 %v182
      %v289 = vunpack.c.l.b16 %v183
      %v290 = vunpack.c.h.b16 %v183
      %v291 = vunpack.c.l.b16 %v184
      %v292 = vunpack.c.h.b16 %v184
      %v293 = vunpack.c.l.b16 %v185
      %v294 = vunpack.c.h.b16 %v185
      %v295 = vunpack.c.l.b16 %v186
      %v296 = vunpack.c.h.b16 %v186
      %v297 = vunpack.c.l.b16 %v187
      %v298 = vunpack.c.h.b16 %v187
      %v299 = vunpack.c.l.b16 %v188
      %v300 = vunpack.c.h.b16 %v188
      %v301 = vunpack.c.l.b16 %v189
      %v302 = vunpack.c.h.b16 %v189
      %v303 = vunpack.c.l.b16 %v190
      %v304 = vunpack.c.h.b16 %v190
      %v305 = vunpack.c.l.b16 %v191
      %v306 = vunpack.c.h.b16 %v191
      %v307 = vunpack.c.l.b16 %v192
      %v308 = vunpack.c.h.b16 %v192
      %v309 = vunpack.c.l.b16 %v193
      %v310 = vunpack.c.h.b16 %v193
      %v311 = vunpack.c.l.b16 %v194
      %v312 = vunpack.c.h.b16 %v194
      %v313 = vunpack.c.l.b16 %v195
      %v314 = vunpack.c.h.b16 %v195
      %v315 = vunpack.c.l.b16 %v196
      %v316 = vunpack.c.h.b16 %v196
      %v317 = vunpack.c.l.b16 %v197
      %v318 = vunpack.c.h.b16 %v197
      %v319 = vunpack.c.l.b16 %v198
      %v320 = vunpack.c.h.b16 %v198
      %v321 = vunpack.c.l.b16 %v199
      %v322 = vunpack.c.h.b16 %v199
      %v323 = vunpack.c.l.b16 %v200
      %v324 = vunpack.c.h.b16 %v200
      %v325 = vunpack.c.l.b16 %v201
      %v326 = vunpack.c.h.b16 %v201
      %v327 = vunpack.c.l.b16 %v202
      %v328 = vunpack.c.h.b16 %v202
      %v329 = vunpack.c.l.b16 %v203
      %v330 = vunpack.c.h.b16 %v203
      %v331 = vunpack.c.l.b16 %v204
      %v332 = vunpack.c.h.b16 %v204
      %v333 = vunpack.c.l.b16 %v205
      %v334 = vunpack.c.h.b16 %v205
      %v335 = vunpack.c.l.b16 %v206
      %v336 = vunpack.c.h.b16 %v206
      %v337 = vunpack.c.l.b16 %v207
      %v338 = vunpack.c.h.b16 %v207
      %v339 = vunpack.c.l.b16 %v208
      %v340 = vunpack.c.h.b16 %v208
      %v341 = vpack.c.b16 %v279, %v277
      %v342 = vpack.c.b16 %v280, %v278
      %v343 = vpack.c.b16 %v283, %v281
      %v344 = vpack.c.b16 %v284, %v282
      %v345 = vpack.c.b16 %v287, %v285
      %v346 = vpack.c.b16 %v288, %v286
      %v347 = vpack.c.b16 %v291, %v289
      %v348 = vpack.c.b16 %v292, %v290
      %v349 = vpack.c.b16 %v295, %v293
      %v350 = vpack.c.b16 %v296, %v294
      %v351 = vpack.c.b16 %v299, %v297
      %v352 = vpack.c.b16 %v300, %v298
      %v353 = vpack.c.b16 %v303, %v301
      %v354 = vpack.c.b16 %v304, %v302
      %v355 = vpack.c.b16 %v307, %v305
      %v356 = vpack.c.b16 %v308, %v306
      %v357 = vpack.c.b16 %v311, %v309
      %v358 = vpack.c.b16 %v312, %v310
      %v359 = vpack.c.b16 %v315, %v313
      %v360 = vpack.c.b16 %v316, %v314
      %v361 = vpack.c.b16 %v319, %v317
      %v362 = vpack.c.b16 %v320, %v318
      %v363 = vpack.c.b16 %v323, %v321
      %v364 = vpack.c.b16 %v324, %v322
      %v365 = vpack.c.b16 %v327, %v325
      %v366 = vpack.c.b16 %v328, %v326
      %v367 = vpack.c.b16 %v331, %v329
      %v368 = vpack.c.b16 %v332, %v330
      %v369 = vpack.c.b16 %v335, %v333
      %v370 = vpack.c.b16 %v336, %v334
      %v371 = vpack.c.b16 %v339, %v337
      %v372 = vpack.c.b16 %v340, %v338
      %v437 = vunpack.c.l.b16 %v209
      %v438 = vunpack.c.l.b16 %v210
      %v439 = vunpack.c.l.b16 %v211
      %v440 = vunpack.c.l.b16 %v212
      %v441 = vunpack.c.l.b16 %v213
      %v442 = vunpack.c.l.b16 %v214
      %v443 = vunpack.c.l.b16 %v215
      %v444 = vunpack.c.l.b16 %v216
      %v445 = vunpack.c.l.b16 %v217
      %v446 = vunpack.c.l.b16 %v218
      %v447 = vunpack.c.l.b16 %v219
      %v448 = vunpack.c.l.b16 %v220
      %v449 = vunpack.c.l.b16 %v221
      %v450 = vunpack.c.l.b16 %v222
      %v451 = vunpack.c.l.b16 %v223
      %v452 = vunpack.c.l.b16 %v224
      %v453 = vunpack.c.l.b16 %v225
      %v454 = vunpack.c.l.b16 %v226
      %v455 = vunpack.c.l.b16 %v227
      %v456 = vunpack.c.l.b16 %v228
      %v457 = vunpack.c.l.b16 %v229
      %v458 = vunpack.c.l.b16 %v230
      %v459 = vunpack.c.l.b16 %v231
      %v460 = vunpack.c.l.b16 %v232
      %v461 = vunpack.c.l.b16 %v233
      %v462 = vunpack.c.l.b16 %v234
      %v463 = vunpack.c.l.b16 %v235
      %v464 = vunpack.c.l.b16 %v236
      %v465 = vunpack.c.l.b16 %v237
      %v466 = vunpack.c.l.b16 %v238
      %v467 = vunpack.c.l.b16 %v239
      %v468 = vunpack.c.l.b16 %v240
      %v469 = vpack.c.b16 %v438, %v437
      %v470 = vpack.c.b16 %v440, %v439
      %v471 = vpack.c.b16 %v442, %v441
      %v472 = vpack.c.b16 %v444, %v443
      %v473 = vpack.c.b16 %v446, %v445
      %v474 = vpack.c.b16 %v448, %v447
      %v475 = vpack.c.b16 %v450, %v449
      %v476 = vpack.c.b16 %v452, %v451
      %v477 = vpack.c.b16 %v454, %v453
      %v478 = vpack.c.b16 %v456, %v455
      %v479 = vpack.c.b16 %v458, %v457
      %v480 = vpack.c.b16 %v460, %v459
      %v481 = vpack.c.b16 %v462, %v461
      %v482 = vpack.c.b16 %v464, %v463
      %v483 = vpack.c.b16 %v466, %v465
      %v484 = vpack.c.b16 %v468, %v467
      %501 = vmatpush.bf16.msra.mxu0 %v476
      %502 = vmatpush.bf16.msra.mxu0 %v475
      %503 = vmatpush.bf16.msra.mxu0 %v474
      %504 = vmatpush.bf16.msra.mxu0 %v473
      %505 = vmatpush.bf16.msra.mxu0 %v472
      %506 = vmatpush.bf16.msra.mxu0 %v471
      %507 = vmatpush.bf16.msra.mxu0 %v470
      %508 = vmatpush.bf16.msra.mxu0 %v469
      %509 = vmatmul.bf16.gmra.mxu0 %v341
      %v510 = vpop.f32.mrf.mxu0
      %v511 = vadd.f32 %v243, %v510
      %v512 = vpop.f32.mrf.mxu0
      %v513 = vadd.f32 %v243, %v512
      %514 = vmatmul.bf16.gmra.mxu0 %v343
      %v515 = vpop.f32.mrf.mxu0
      %v516 = vadd.f32 %v243, %v515
      %v517 = vpop.f32.mrf.mxu0
      %v518 = vadd.f32 %v243, %v517
      %519 = vmatmul.bf16.gmra.mxu0 %v345
      %v520 = vpop.f32.mrf.mxu0
      %v521 = vadd.f32 %v243, %v520
      %v522 = vpop.f32.mrf.mxu0
      %v523 = vadd.f32 %v243, %v522
      %524 = vmatmul.bf16.gmra.mxu0 %v347
      %v525 = vpop.f32.mrf.mxu0
      %v526 = vadd.f32 %v243, %v525
      %v527 = vpop.f32.mrf.mxu0
      %v528 = vadd.f32 %v243, %v527
      %529 = vmatmul.bf16.gmra.mxu0 %v349
      %v530 = vpop.f32.mrf.mxu0
      %v531 = vadd.f32 %v243, %v530
      %v532 = vpop.f32.mrf.mxu0
      %v533 = vadd.f32 %v243, %v532
      %534 = vmatmul.bf16.gmra.mxu0 %v351
      %v535 = vpop.f32.mrf.mxu0
      %v536 = vadd.f32 %v243, %v535
      %v537 = vpop.f32.mrf.mxu0
      %v538 = vadd.f32 %v243, %v537
      %539 = vmatmul.bf16.gmra.mxu0 %v353
      %v540 = vpop.f32.mrf.mxu0
      %v541 = vadd.f32 %v243, %v540
      %v542 = vpop.f32.mrf.mxu0
      %v543 = vadd.f32 %v243, %v542
      %544 = vmatmul.bf16.gmra.mxu0 %v355
      %v545 = vpop.f32.mrf.mxu0
      %v546 = vadd.f32 %v243, %v545
      %v547 = vpop.f32.mrf.mxu0
      %v548 = vadd.f32 %v243, %v547
      %549 = vmatmul.bf16.gmra.mxu0 %v357
      %v550 = vpop.f32.mrf.mxu0
      %v551 = vadd.f32 %v243, %v550
      %v552 = vpop.f32.mrf.mxu0
      %v553 = vadd.f32 %v243, %v552
      %554 = vmatmul.bf16.gmra.mxu0 %v359
      %v555 = vpop.f32.mrf.mxu0
      %v556 = vadd.f32 %v243, %v555
      %v557 = vpop.f32.mrf.mxu0
      %v558 = vadd.f32 %v243, %v557
      %559 = vmatmul.bf16.gmra.mxu0 %v361
      %v560 = vpop.f32.mrf.mxu0
      %v561 = vadd.f32 %v243, %v560
      %v562 = vpop.f32.mrf.mxu0
      %v563 = vadd.f32 %v243, %v562
      %564 = vmatmul.bf16.gmra.mxu0 %v363
      %v565 = vpop.f32.mrf.mxu0
      %v566 = vadd.f32 %v243, %v565
      %v567 = vpop.f32.mrf.mxu0
      %v568 = vadd.f32 %v243, %v567
      %569 = vmatmul.bf16.gmra.mxu0 %v365
      %v570 = vpop.f32.mrf.mxu0
      %v571 = vadd.f32 %v243, %v570
      %v572 = vpop.f32.mrf.mxu0
      %v573 = vadd.f32 %v243, %v572
      %574 = vmatmul.bf16.gmra.mxu0 %v367
      %v575 = vpop.f32.mrf.mxu0
      %v576 = vadd.f32 %v243, %v575
      %v577 = vpop.f32.mrf.mxu0
      %v578 = vadd.f32 %v243, %v577
      %579 = vmatmul.bf16.gmra.mxu0 %v369
      %v580 = vpop.f32.mrf.mxu0
      %v581 = vadd.f32 %v243, %v580
      %v582 = vpop.f32.mrf.mxu0
      %v583 = vadd.f32 %v243, %v582
      %584 = vmatmul.bf16.gmra.mxu0 %v371
      %v585 = vpop.f32.mrf.mxu0
      %v586 = vadd.f32 %v243, %v585
      %v587 = vpop.f32.mrf.mxu0
      %v588 = vadd.f32 %v243, %v587
      %589 = vdwg.mxu0
      %590 = vmatpush.bf16.msra.mxu0 %v484
      %591 = vmatpush.bf16.msra.mxu0 %v483
      %592 = vmatpush.bf16.msra.mxu0 %v482
      %593 = vmatpush.bf16.msra.mxu0 %v481
      %594 = vmatpush.bf16.msra.mxu0 %v480
      %595 = vmatpush.bf16.msra.mxu0 %v479
      %596 = vmatpush.bf16.msra.mxu0 %v478
      %597 = vmatpush.bf16.msra.mxu0 %v477
      %598 = vmatmul.bf16.gmra.mxu0 %v342
      %v599 = vpop.f32.mrf.mxu0
      %v600 = vadd.f32 %v511, %v599
      %v601 = vpop.f32.mrf.mxu0
      %v602 = vadd.f32 %v513, %v601
      %603 = vmatmul.bf16.gmra.mxu0 %v344
      %v604 = vpop.f32.mrf.mxu0
      %v605 = vadd.f32 %v516, %v604
      %v606 = vpop.f32.mrf.mxu0
      %v607 = vadd.f32 %v518, %v606
      %608 = vmatmul.bf16.gmra.mxu0 %v346
      %v609 = vpop.f32.mrf.mxu0
      %v610 = vadd.f32 %v521, %v609
      %v611 = vpop.f32.mrf.mxu0
      %v612 = vadd.f32 %v523, %v611
      %613 = vmatmul.bf16.gmra.mxu0 %v348
      %v614 = vpop.f32.mrf.mxu0
      %v615 = vadd.f32 %v526, %v614
      %v616 = vpop.f32.mrf.mxu0
      %v617 = vadd.f32 %v528, %v616
      %618 = vmatmul.bf16.gmra.mxu0 %v350
      %v619 = vpop.f32.mrf.mxu0
      %v620 = vadd.f32 %v531, %v619
      %v621 = vpop.f32.mrf.mxu0
      %v622 = vadd.f32 %v533, %v621
      %623 = vmatmul.bf16.gmra.mxu0 %v352
      %v624 = vpop.f32.mrf.mxu0
      %v625 = vadd.f32 %v536, %v624
      %v626 = vpop.f32.mrf.mxu0
      %v627 = vadd.f32 %v538, %v626
      %628 = vmatmul.bf16.gmra.mxu0 %v354
      %v629 = vpop.f32.mrf.mxu0
      %v630 = vadd.f32 %v541, %v629
      %v631 = vpop.f32.mrf.mxu0
      %v632 = vadd.f32 %v543, %v631
      %633 = vmatmul.bf16.gmra.mxu0 %v356
      %v634 = vpop.f32.mrf.mxu0
      %v635 = vadd.f32 %v546, %v634
      %v636 = vpop.f32.mrf.mxu0
      %v637 = vadd.f32 %v548, %v636
      %638 = vmatmul.bf16.gmra.mxu0 %v358
      %v639 = vpop.f32.mrf.mxu0
      %v640 = vadd.f32 %v551, %v639
      %v641 = vpop.f32.mrf.mxu0
      %v642 = vadd.f32 %v553, %v641
      %643 = vmatmul.bf16.gmra.mxu0 %v360
      %v644 = vpop.f32.mrf.mxu0
      %v645 = vadd.f32 %v556, %v644
      %v646 = vpop.f32.mrf.mxu0
      %v647 = vadd.f32 %v558, %v646
      %648 = vmatmul.bf16.gmra.mxu0 %v362
      %v649 = vpop.f32.mrf.mxu0
      %v650 = vadd.f32 %v561, %v649
      %v651 = vpop.f32.mrf.mxu0
      %v652 = vadd.f32 %v563, %v651
      %653 = vmatmul.bf16.gmra.mxu0 %v364
      %v654 = vpop.f32.mrf.mxu0
      %v655 = vadd.f32 %v566, %v654
      %v656 = vpop.f32.mrf.mxu0
      %v657 = vadd.f32 %v568, %v656
      %658 = vmatmul.bf16.gmra.mxu0 %v366
      %v659 = vpop.f32.mrf.mxu0
      %v660 = vadd.f32 %v571, %v659
      %v661 = vpop.f32.mrf.mxu0
      %v662 = vadd.f32 %v573, %v661
      %663 = vmatmul.bf16.gmra.mxu0 %v368
      %v664 = vpop.f32.mrf.mxu0
      %v665 = vadd.f32 %v576, %v664
      %v666 = vpop.f32.mrf.mxu0
      %v667 = vadd.f32 %v578, %v666
      %668 = vmatmul.bf16.gmra.mxu0 %v370
      %v669 = vpop.f32.mrf.mxu0
      %v670 = vadd.f32 %v581, %v669
      %v671 = vpop.f32.mrf.mxu0
      %v672 = vadd.f32 %v583, %v671
      %673 = vmatmul.bf16.gmra.mxu0 %v372
      %v674 = vpop.f32.mrf.mxu0
      %v675 = vadd.f32 %v586, %v674
      %v676 = vpop.f32.mrf.mxu0
      %v677 = vadd.f32 %v588, %v676
      %678 = vdwg.mxu0
      %vm679 = vcmp.gt.f32.partialorder %v600, 0.0
      %vm680 = vcmp.gt.f32.partialorder %v602, 0.0
      %vm681 = vcmp.gt.f32.partialorder %v605, 0.0
      %vm682 = vcmp.gt.f32.partialorder %v607, 0.0
      %vm683 = vcmp.gt.f32.partialorder %v610, 0.0
      %vm684 = vcmp.gt.f32.partialorder %v612, 0.0
      %vm685 = vcmp.gt.f32.partialorder %v615, 0.0
      %vm686 = vcmp.gt.f32.partialorder %v617, 0.0
      %vm687 = vcmp.gt.f32.partialorder %v620, 0.0
      %vm688 = vcmp.gt.f32.partialorder %v622, 0.0
      %vm689 = vcmp.gt.f32.partialorder %v625, 0.0
      %vm690 = vcmp.gt.f32.partialorder %v627, 0.0
      %vm691 = vcmp.gt.f32.partialorder %v630, 0.0
      %vm692 = vcmp.gt.f32.partialorder %v632, 0.0
      %vm693 = vcmp.gt.f32.partialorder %v635, 0.0
      %vm694 = vcmp.gt.f32.partialorder %v637, 0.0
      %vm695 = vcmp.gt.f32.partialorder %v640, 0.0
      %vm696 = vcmp.gt.f32.partialorder %v642, 0.0
      %vm697 = vcmp.gt.f32.partialorder %v645, 0.0
      %vm698 = vcmp.gt.f32.partialorder %v647, 0.0
      %vm699 = vcmp.gt.f32.partialorder %v650, 0.0
      %vm700 = vcmp.gt.f32.partialorder %v652, 0.0
      %vm701 = vcmp.gt.f32.partialorder %v655, 0.0
      %vm702 = vcmp.gt.f32.partialorder %v657, 0.0
      %vm703 = vcmp.gt.f32.partialorder %v660, 0.0
      %vm704 = vcmp.gt.f32.partialorder %v662, 0.0
      %vm705 = vcmp.gt.f32.partialorder %v665, 0.0
      %vm706 = vcmp.gt.f32.partialorder %v667, 0.0
      %vm707 = vcmp.gt.f32.partialorder %v670, 0.0
      %vm708 = vcmp.gt.f32.partialorder %v672, 0.0
      %vm709 = vcmp.gt.f32.partialorder %v675, 0.0
      %vm710 = vcmp.gt.f32.partialorder %v677, 0.0
      %v711 = vmul.f32 %v600, 0.2
      %v712 = vmul.f32 %v602, 0.2
      %v713 = vmul.f32 %v605, 0.2
      %v714 = vmul.f32 %v607, 0.2
      %v715 = vmul.f32 %v610, 0.2
      %v716 = vmul.f32 %v612, 0.2
      %v717 = vmul.f32 %v615, 0.2
      %v718 = vmul.f32 %v617, 0.2
      %v719 = vmul.f32 %v620, 0.2
      %v720 = vmul.f32 %v622, 0.2
      %v721 = vmul.f32 %v625, 0.2
      %v722 = vmul.f32 %v627, 0.2
      %v723 = vmul.f32 %v630, 0.2
      %v724 = vmul.f32 %v632, 0.2
      %v725 = vmul.f32 %v635, 0.2
      %v726 = vmul.f32 %v637, 0.2
      %v727 = vmul.f32 %v640, 0.2
      %v728 = vmul.f32 %v642, 0.2
      %v729 = vmul.f32 %v645, 0.2
      %v730 = vmul.f32 %v647, 0.2
      %v731 = vmul.f32 %v650, 0.2
      %v732 = vmul.f32 %v652, 0.2
      %v733 = vmul.f32 %v655, 0.2
      %v734 = vmul.f32 %v657, 0.2
      %v735 = vmul.f32 %v660, 0.2
      %v736 = vmul.f32 %v662, 0.2
      %v737 = vmul.f32 %v665, 0.2
      %v738 = vmul.f32 %v667, 0.2
      %v739 = vmul.f32 %v670, 0.2
      %v740 = vmul.f32 %v672, 0.2
      %v741 = vmul.f32 %v675, 0.2
      %v742 = vmul.f32 %v677, 0.2
      %v743 = vsel %vm679, %v600, %v711
      %v744 = vsel %vm680, %v602, %v712
      %v745 = vsel %vm681, %v605, %v713
      %v746 = vsel %vm682, %v607, %v714
      %v747 = vsel %vm683, %v610, %v715
      %v748 = vsel %vm684, %v612, %v716
      %v749 = vsel %vm685, %v615, %v717
      %v750 = vsel %vm686, %v617, %v718
      %v751 = vsel %vm687, %v620, %v719
      %v752 = vsel %vm688, %v622, %v720
      %v753 = vsel %vm689, %v625, %v721
      %v754 = vsel %vm690, %v627, %v722
      %v755 = vsel %vm691, %v630, %v723
      %v756 = vsel %vm692, %v632, %v724
      %v757 = vsel %vm693, %v635, %v725
      %v758 = vsel %vm694, %v637, %v726
      %v759 = vsel %vm695, %v640, %v727
      %v760 = vsel %vm696, %v642, %v728
      %v761 = vsel %vm697, %v645, %v729
      %v762 = vsel %vm698, %v647, %v730
      %v763 = vsel %vm699, %v650, %v731
      %v764 = vsel %vm700, %v652, %v732
      %v765 = vsel %vm701, %v655, %v733
      %v766 = vsel %vm702, %v657, %v734
      %v767 = vsel %vm703, %v660, %v735
      %v768 = vsel %vm704, %v662, %v736
      %v769 = vsel %vm705, %v665, %v737
      %v770 = vsel %vm706, %v667, %v738
      %v771 = vsel %vm707, %v670, %v739
      %v772 = vsel %vm708, %v672, %v740
      %v773 = vsel %vm709, %v675, %v741
      %v774 = vsel %vm710, %v677, %v742
      %v775 = vpack.c.bf16 %v743, %v743
      %v776 = vpack.c.bf16 %v744, %v744
      %v777 = vpack.c.bf16 %v745, %v745
      %v778 = vpack.c.bf16 %v746, %v746
      %v779 = vpack.c.bf16 %v747, %v747
      %v780 = vpack.c.bf16 %v748, %v748
      %v781 = vpack.c.bf16 %v749, %v749
      %v782 = vpack.c.bf16 %v750, %v750
      %v783 = vpack.c.bf16 %v751, %v751
      %v784 = vpack.c.bf16 %v752, %v752
      %v785 = vpack.c.bf16 %v753, %v753
      %v786 = vpack.c.bf16 %v754, %v754
      %v787 = vpack.c.bf16 %v755, %v755
      %v788 = vpack.c.bf16 %v756, %v756
      %v789 = vpack.c.bf16 %v757, %v757
      %v790 = vpack.c.bf16 %v758, %v758
      %v791 = vpack.c.bf16 %v759, %v759
      %v792 = vpack.c.bf16 %v760, %v760
      %v793 = vpack.c.bf16 %v761, %v761
      %v794 = vpack.c.bf16 %v762, %v762
      %v795 = vpack.c.bf16 %v763, %v763
      %v796 = vpack.c.bf16 %v764, %v764
      %v797 = vpack.c.bf16 %v765, %v765
      %v798 = vpack.c.bf16 %v766, %v766
      %v799 = vpack.c.bf16 %v767, %v767
      %v800 = vpack.c.bf16 %v768, %v768
      %v801 = vpack.c.bf16 %v769, %v769
      %v802 = vpack.c.bf16 %v770, %v770
      %v803 = vpack.c.bf16 %v771, %v771
      %v804 = vpack.c.bf16 %v772, %v772
      %v805 = vpack.c.bf16 %v773, %v773
      %v806 = vpack.c.bf16 %v774, %v774
      %807 = vst [vmem:[%s175] sm:$0xf] %v775
      %808 = vst [vmem:[%s175 + $0x4] sm:$0xf] %v776
      %809 = vst [vmem:[%s175 + $0x8] sm:$0xf] %v777
      %810 = vst [vmem:[%s175 + $0xc] sm:$0xf] %v778
      %811 = vst [vmem:[%s175 + $0x10] sm:$0xf] %v779
      %812 = vst [vmem:[%s175 + $0x14] sm:$0xf] %v780
      %813 = vst [vmem:[%s175 + $0x18] sm:$0xf] %v781
      %814 = vst [vmem:[%s175 + $0x1c] sm:$0xf] %v782
      %815 = vst [vmem:[%s175 + $0x20] sm:$0xf] %v783
      %816 = vst [vmem:[%s175 + $0x24] sm:$0xf] %v784
      %817 = vst [vmem:[%s175 + $0x28] sm:$0xf] %v785
      %818 = vst [vmem:[%s175 + $0x2c] sm:$0xf] %v786
      %819 = vst [vmem:[%s175 + $0x30] sm:$0xf] %v787
      %820 = vst [vmem:[%s175 + $0x34] sm:$0xf] %v788
      %821 = vst [vmem:[%s175 + $0x38] sm:$0xf] %v789
      %822 = vst [vmem:[%s175 + $0x3c] sm:$0xf] %v790
      %823 = vst [vmem:[%s175 + $0x40] sm:$0xf] %v791
      %824 = vst [vmem:[%s175 + $0x44] sm:$0xf] %v792
      %825 = vst [vmem:[%s175 + $0x48] sm:$0xf] %v793
      %826 = vst [vmem:[%s175 + $0x4c] sm:$0xf] %v794
      %827 = vst [vmem:[%s175 + $0x50] sm:$0xf] %v795
      %828 = vst [vmem:[%s175 + $0x54] sm:$0xf] %v796
      %829 = vst [vmem:[%s175 + $0x58] sm:$0xf] %v797
      %830 = vst [vmem:[%s175 + $0x5c] sm:$0xf] %v798
      %831 = vst [vmem:[%s175 + $0x60] sm:$0xf] %v799
      %832 = vst [vmem:[%s175 + $0x64] sm:$0xf] %v800
      %833 = vst [vmem:[%s175 + $0x68] sm:$0xf] %v801
      %834 = vst [vmem:[%s175 + $0x6c] sm:$0xf] %v802
      %835 = vst [vmem:[%s175 + $0x70] sm:$0xf] %v803
      %836 = vst [vmem:[%s175 + $0x74] sm:$0xf] %v804
      %837 = vst [vmem:[%s175 + $0x78] sm:$0xf] %v805
      %838 = vst [vmem:[%s175 + $0x7c] sm:$0xf] %v806
      %s839 = smul.u32 32, %s14
      %p840 = scmp.lt.s32.totalorder %s839, 63
      %s841 = scalar_select %p840, %s839, 63
      %s842 = smul.addr %s841, 4
      %s843 = scalar_lea.vmem %s3, %s842
      // Predicated region
      $region33: #{discriminator_forward.4} parent=31 // pred_check
        %p844 = pneg %p100
      $region34: #{discriminator_forward.4} parent=31 // pred_check_branch
        %846 = sbr.rel (%p844) target = $region36
      $region35: #{discriminator_forward.4} parent=31 // pred_region
        %s847 = smul.u32 32, %s14
      $region36: #{discriminator_forward.4} parent=31 // pred_fallthru
        _
    $region32: #{discriminator_forward.4} parent=5 // pred_fallthru
      _
    %p848 = scmp.le.s32.totalorder 2, %s9
    // Predicated region
    $region37: #{discriminator_forward.4} parent=5 // pred_check
      %p849 = pneg %p848
    $region38: #{discriminator_forward.4} parent=5 // pred_check_branch
      %851 = sbr.rel (%p849) target = $region40
    $region39: #{discriminator_forward.4} parent=5 // pred_region
      %s852 = ssub.s32 %s9, 2
      // Predicated region
      $region41: #{discriminator_forward.4} parent=39 // pred_check
        %p853 = pneg %p106
      $region42: #{discriminator_forward.4} parent=39 // pred_check_branch
        %855 = sbr.rel (%p853) target = $region44
      $region43: #{discriminator_forward.4} parent=39 // pred_region
        %s856 = smul.u32 32, %s15
        %p857 = scmp.lt.s32.totalorder %s856, 63
        %s858 = scalar_select %p857, %s856, 63
        %s859 = smul.addr %s858, 4
        %s860 = scalar_lea.vmem %s3, %s859
      $region44: #{discriminator_forward.4} parent=39 // pred_fallthru
        _
    $region40: #{discriminator_forward.4} parent=5 // pred_fallthru
      _
  $region6: #{discriminator_forward.4} parent=0 // loop_footer
    %s13 = sadd.s32 1, %s9
  $region7: #{discriminator_forward.4} parent=0 // loop_footer_branch
    %8 = sbr.rel target = $region3
  $region8: #{discriminator_forward.4} parent=0 // loop_exit
    _

// kernel: discriminator_forward.5
$region0: #{discriminator_forward.5}
  #allocation0 [shape = 'u32[]', space=smem, size = 0x4, offset = 0x4, fixed_abs, tag = 'smem constant byte address 0x4 - core index']
  #allocation1 [shape = 'u32[72,128]{1,0:T(1,128)}', space=vmem, size = 0x9000, scoped, tag = 'internal scratch']
  %s0 = inlined_call_operand.vmem [shape: bf16[128,256], index: 0, kind: input, shape index: {}]
  %s1 = inlined_call_operand.vmem [shape: bf16[256,128], index: 1, kind: input, shape index: {}]
  %s2 = inlined_call_operand.vmem [shape: f32[1,128], index: 2, kind: input, shape index: {}]
  %s3 = inlined_call_operand.vmem [shape: bf16[128,128], index: 3, kind: output, shape index: {}]
  %s4 = sld [smem:[#allocation0]]
  $region45: #{discriminator_forward.5} parent=0
    _
  %s6 = ssub.s32 1, %s4
  %s7 = scalar_select 0, %s6, %s4
  loop: start=0, step=1, limit=4
  $region2: #{discriminator_forward.5} parent=0 // loop_pre_header
    _
  $region3: #{discriminator_forward.5} parent=0 // loop_header
    %s9 = sphi 0, %s13
    %p10 = scmp.ge.s32.totalorder %s9, 4
    %s19 = sphi 0, %s21
    %s22 = sphi 0, %s19
    %s23 = sphi 0, %s22
    %s39 = sphi 0, %s23
    %s43 = sphi 0, %s43
    %s45 = sphi 0, %s43
    %s46 = sphi 0, %s45
    %s60 = sphi 0, %s46
    %s64 = sphi 0, %s64
    %s66 = sphi 0, %s64
    %s67 = sphi 0, %s66
    %s81 = sphi 0, %s67
    %s87 = sphi 0, %s89
    %s90 = sphi 0, %s87
    %s91 = sphi 0, %s90
    %s107 = sphi 0, %s91
  $region4: #{discriminator_forward.5} parent=0 // loop_header_branch
    %12 = sbr.rel (%p10) target = $region8
  $region5: #{discriminator_forward.5} parent=0 // loop_body
    %s14 = ssub.s32 %s9, 1
    %s15 = ssub.s32 %s9, 2
    %s16 = sadd.s32 %s9, 1
    %s17 = ssub.s32 %s9, %s16
    %p18 = scmp.eq.s32.totalorder %s17, 0
    %s20 = sadd.s32 %s19, 1
    %s21 = scalar_select %p18, %s19, %s20
    %p24 = pneg %p18
    %p25 = scmp.eq.s32.totalorder %s9, 1
    %p26 = por %p24, %p25
    %p27 = scmp.ne.s32.totalorder %s19, %s22
    %p28 = scmp.eq.s32.totalorder %s9, 0
    %p29 = por %p27, %p28
    %p30 = scmp.ne.s32.totalorder %s19, %s22
    %p31 = scmp.eq.s32.totalorder %s14, 1
    %p32 = por %p30, %p31
    %p33 = scmp.ne.s32.totalorder %s22, %s23
    %p34 = scmp.eq.s32.totalorder %s14, 0
    %p35 = por %p33, %p34
    %p36 = scmp.ne.s32.totalorder %s22, %s23
    %p37 = scmp.eq.s32.totalorder %s15, 1
    %p38 = por %p36, %p37
    %p40 = scmp.ne.s32.totalorder %s23, %s39
    %p41 = scmp.eq.s32.totalorder %s15, 0
    %p42 = por %p40, %p41
    %s44 = sadd.s32 %s43, 1
    %p47 = scmp.eq.s32.totalorder %s9, 1
    %p48 = scmp.ne.s32.totalorder %s43, %s45
    %p49 = scmp.eq.s32.totalorder %s9, 0
    %p50 = por %p48, %p49
    %p51 = scmp.ne.s32.totalorder %s43, %s45
    %p52 = scmp.eq.s32.totalorder %s14, 1
    %p53 = por %p51, %p52
    %p54 = scmp.ne.s32.totalorder %s45, %s46
    %p55 = scmp.eq.s32.totalorder %s14, 0
    %p56 = por %p54, %p55
    %p57 = scmp.ne.s32.totalorder %s45, %s46
    %p58 = scmp.eq.s32.totalorder %s15, 1
    %p59 = por %p57, %p58
    %p61 = scmp.ne.s32.totalorder %s46, %s60
    %p62 = scmp.eq.s32.totalorder %s15, 0
    %p63 = por %p61, %p62
    %s65 = sadd.s32 %s64, 1
    %p68 = scmp.eq.s32.totalorder %s9, 1
    %p69 = scmp.ne.s32.totalorder %s64, %s66
    %p70 = scmp.eq.s32.totalorder %s9, 0
    %p71 = por %p69, %p70
    %p72 = scmp.ne.s32.totalorder %s64, %s66
    %p73 = scmp.eq.s32.totalorder %s14, 1
    %p74 = por %p72, %p73
    %p75 = scmp.ne.s32.totalorder %s66, %s67
    %p76 = scmp.eq.s32.totalorder %s14, 0
    %p77 = por %p75, %p76
    %p78 = scmp.ne.s32.totalorder %s66, %s67
    %p79 = scmp.eq.s32.totalorder %s15, 1
    %p80 = por %p78, %p79
    %p82 = scmp.ne.s32.totalorder %s67, %s81
    %p83 = scmp.eq.s32.totalorder %s15, 0
    %p84 = por %p82, %p83
    %s85 = ssub.s32 %s9, %s16
    %p86 = scmp.eq.s32.totalorder %s85, 0
    %s88 = sadd.s32 %s87, 1
    %s89 = scalar_select %p86, %s87, %s88
    %p92 = pneg %p86
    %p93 = scmp.eq.s32.totalorder %s9, 1
    %p94 = por %p92, %p93
    %p95 = scmp.ne.s32.totalorder %s87, %s90
    %p96 = scmp.eq.s32.totalorder %s9, 0
    %p97 = por %p95, %p96
    %p98 = scmp.ne.s32.totalorder %s87, %s90
    %p99 = scmp.eq.s32.totalorder %s14, 1
    %p100 = por %p98, %p99
    %p101 = scmp.ne.s32.totalorder %s90, %s91
    %p102 = scmp.eq.s32.totalorder %s14, 0
    %p103 = por %p101, %p102
    %p104 = scmp.ne.s32.totalorder %s90, %s91
    %p105 = scmp.eq.s32.totalorder %s15, 1
    %p106 = por %p104, %p105
    %p108 = scmp.ne.s32.totalorder %s91, %s107
    %p109 = scmp.eq.s32.totalorder %s15, 0
    %p110 = por %p108, %p109
    %p111 = scmp.le.s32.totalorder 1, %s9
    %p112 = scmp.lt.s32.totalorder %s9, 3
    %p113 = pnand %p111, %p112
    %p114 = pneg %p113
    // Predicated region
    $region9: #{discriminator_forward.5} parent=5 // pred_check
      _
    $region10: #{discriminator_forward.5} parent=5 // pred_check_branch
      %116 = sbr.rel (%p113) target = $region12
    $region11: #{discriminator_forward.5} parent=5 // pred_region
      %s117 = ssub.s32 %s9, 1
      // Predicated region
      $region13: #{discriminator_forward.5} parent=11 // pred_check
        %p118 = pneg %p56
      $region14: #{discriminator_forward.5} parent=11 // pred_check_branch
        %120 = sbr.rel (%p118) target = $region16
      $region15: #{discriminator_forward.5} parent=11 // pred_region
        _
      $region16: #{discriminator_forward.5} parent=11 // pred_fallthru
        _
      // Predicated region
      $region17: #{discriminator_forward.5} parent=11 // pred_check
        %p121 = pneg %p77
      $region18: #{discriminator_forward.5} parent=11 // pred_check_branch
        %123 = sbr.rel (%p121) target = $region20
      $region19: #{discriminator_forward.5} parent=11 // pred_region
        _
      $region20: #{discriminator_forward.5} parent=11 // pred_fallthru
        _
    $region12: #{discriminator_forward.5} parent=5 // pred_fallthru
      _
    %p124 = scmp.lt.s32.totalorder %s9, 2
    // Predicated region
    $region21: #{discriminator_forward.5} parent=5 // pred_check
      %p125 = pneg %p124
    $region22: #{discriminator_forward.5} parent=5 // pred_check_branch
      %127 = sbr.rel (%p125) target = $region24
    $region23: #{discriminator_forward.5} parent=5 // pred_region
      // Predicated region
      $region25: #{discriminator_forward.5} parent=23 // pred_check
        %p128 = pneg %p29
      $region26: #{discriminator_forward.5} parent=23 // pred_check_branch
        %130 = sbr.rel (%p128) target = $region28
      $region27: #{discriminator_forward.5} parent=23 // pred_region
        %s131 = smul.u32 8, %s9
        %p132 = scmp.lt.s32.totalorder %s131, 15
        %s133 = scalar_select %p132, %s131, 15
        %s134 = smul.addr %s133, 2
        %s135 = smul.addr %s134, 4
        %s136 = scalar_lea.vmem %s0, %s135
        %s137 = smul.u32 8, %s9
      $region28: #{discriminator_forward.5} parent=23 // pred_fallthru
        _
    $region24: #{discriminator_forward.5} parent=5 // pred_fallthru
      _
    %p138 = scmp.le.s32.totalorder 1, %s9
    %p139 = scmp.lt.s32.totalorder %s9, 3
    %p140 = pnand %p138, %p139
    %p141 = pneg %p140
    // Predicated region
    $region29: #{discriminator_forward.5} parent=5 // pred_check
      _
    $region30: #{discriminator_forward.5} parent=5 // pred_check_branch
      %143 = sbr.rel (%p140) target = $region32
    $region31: #{discriminator_forward.5} parent=5 // pred_region
      %s144 = ssub.s32 %s9, 1
      %s145 = smul.u32 8, %s14
      %p146 = scmp.lt.s32.totalorder %s145, 15
      %s147 = scalar_select %p146, %s145, 15
      %s148 = smul.addr %s147, 2
      %s149 = smul.addr %s148, 4
      %s150 = scalar_lea.vmem %s0, %s149
      %p151 = pneg %p35
      %p152 = pneg %p32
      %p153 = pneg %p56
      %p154 = pneg %p53
      %p155 = pneg %p77
      %p156 = pneg %p74
      %p157 = pneg %p103
      %p158 = pneg %p100
      %s159 = smul.u32 8, %s14
      %p160 = scmp.lt.s32.totalorder %s159, 15
      %s161 = scalar_select %p160, %s159, 15
      %s162 = smul.addr %s161, 4
      %s163 = scalar_lea.vmem %s3, %s162
      %s164 = smul.u32 8, %s14
      %p165 = scmp.lt.s32.totalorder %s164, 15
      %s166 = scalar_select %p165, %s164, 15
      %s167 = smul.addr %s166, 2
      %s168 = smul.addr %s167, 4
      %s169 = scalar_lea.vmem %s0, %s168
      %s170 = smul.u32 8, %s14
      %s171 = smul.u32 8, %s14
      %p172 = scmp.lt.s32.totalorder %s171, 15
      %s173 = scalar_select %p172, %s171, 15
      %s174 = smul.addr %s173, 4
      %s175 = scalar_lea.vmem %s3, %s174
      %s176 = smul.u32 8, %s14
      %v177 = vld [vmem:[%s169] sm:$0xff]
      %v178 = vld [vmem:[%s169 + $0x8] sm:$0xff]
      %v179 = vld [vmem:[%s169 + $0x10] sm:$0xff]
      %v180 = vld [vmem:[%s169 + $0x18] sm:$0xff]
      %v181 = vld [vmem:[%s169 + $0x20] sm:$0xff]
      %v182 = vld [vmem:[%s169 + $0x28] sm:$0xff]
      %v183 = vld [vmem:[%s169 + $0x30] sm:$0xff]
      %v184 = vld [vmem:[%s169 + $0x38] sm:$0xff]
      %v185 = vld [vmem:[%s1] sm:$0xf]
      %v186 = vld [vmem:[%s1 + $0x4] sm:$0xf]
      %v187 = vld [vmem:[%s1 + $0x8] sm:$0xf]
      %v188 = vld [vmem:[%s1 + $0xc] sm:$0xf]
      %v189 = vld [vmem:[%s1 + $0x10] sm:$0xf]
      %v190 = vld [vmem:[%s1 + $0x14] sm:$0xf]
      %v191 = vld [vmem:[%s1 + $0x18] sm:$0xf]
      %v192 = vld [vmem:[%s1 + $0x1c] sm:$0xf]
      %v193 = vld [vmem:[%s1 + $0x20] sm:$0xf]
      %v194 = vld [vmem:[%s1 + $0x24] sm:$0xf]
      %v195 = vld [vmem:[%s1 + $0x28] sm:$0xf]
      %v196 = vld [vmem:[%s1 + $0x2c] sm:$0xf]
      %v197 = vld [vmem:[%s1 + $0x30] sm:$0xf]
      %v198 = vld [vmem:[%s1 + $0x34] sm:$0xf]
      %v199 = vld [vmem:[%s1 + $0x38] sm:$0xf]
      %v200 = vld [vmem:[%s1 + $0x3c] sm:$0xf]
      %v201 = vld [vmem:[%s1 + $0x40] sm:$0xf]
      %v202 = vld [vmem:[%s1 + $0x44] sm:$0xf]
      %v203 = vld [vmem:[%s1 + $0x48] sm:$0xf]
      %v204 = vld [vmem:[%s1 + $0x4c] sm:$0xf]
      %v205 = vld [vmem:[%s1 + $0x50] sm:$0xf]
      %v206 = vld [vmem:[%s1 + $0x54] sm:$0xf]
      %v207 = vld [vmem:[%s1 + $0x58] sm:$0xf]
      %v208 = vld [vmem:[%s1 + $0x5c] sm:$0xf]
      %v209 = vld [vmem:[%s1 + $0x60] sm:$0xf]
      %v210 = vld [vmem:[%s1 + $0x64] sm:$0xf]
      %v211 = vld [vmem:[%s1 + $0x68] sm:$0xf]
      %v212 = vld [vmem:[%s1 + $0x6c] sm:$0xf]
      %v213 = vld [vmem:[%s1 + $0x70] sm:$0xf]
      %v214 = vld [vmem:[%s1 + $0x74] sm:$0xf]
      %v215 = vld [vmem:[%s1 + $0x78] sm:$0xf]
      %v216 = vld [vmem:[%s1 + $0x7c] sm:$0xf]
      %v217 = vld [vmem:[%s2] sm:$0x1]
      %v219 = vperm.slane %v217, 0
      %v229 = vunpack.c.l.b16 %v177
      %v230 = vunpack.c.h.b16 %v177
      %v231 = vunpack.c.l.b16 %v178
      %v232 = vunpack.c.h.b16 %v178
      %v233 = vunpack.c.l.b16 %v179
      %v234 = vunpack.c.h.b16 %v179
      %v235 = vunpack.c.l.b16 %v180
      %v236 = vunpack.c.h.b16 %v180
      %v237 = vunpack.c.l.b16 %v181
      %v238 = vunpack.c.h.b16 %v181
      %v239 = vunpack.c.l.b16 %v182
      %v240 = vunpack.c.h.b16 %v182
      %v241 = vunpack.c.l.b16 %v183
      %v242 = vunpack.c.h.b16 %v183
      %v243 = vunpack.c.l.b16 %v184
      %v244 = vunpack.c.h.b16 %v184
      %v245 = vpack.c.b16 %v231, %v229
      %v246 = vpack.c.b16 %v232, %v230
      %v247 = vpack.c.b16 %v235, %v233
      %v248 = vpack.c.b16 %v236, %v234
      %v249 = vpack.c.b16 %v239, %v237
      %v250 = vpack.c.b16 %v240, %v238
      %v251 = vpack.c.b16 %v243, %v241
      %v252 = vpack.c.b16 %v244, %v242
      %v293 = vunpack.c.l.b16 %v185
      %v294 = vunpack.c.l.b16 %v186
      %v295 = vunpack.c.l.b16 %v187
      %v296 = vunpack.c.l.b16 %v188
      %v297 = vunpack.c.l.b16 %v189
      %v298 = vunpack.c.l.b16 %v190
      %v299 = vunpack.c.l.b16 %v191
      %v300 = vunpack.c.l.b16 %v192
      %v301 = vunpack.c.l.b16 %v193
      %v302 = vunpack.c.l.b16 %v194
      %v303 = vunpack.c.l.b16 %v195
      %v304 = vunpack.c.l.b16 %v196
      %v305 = vunpack.c.l.b16 %v197
      %v306 = vunpack.c.l.b16 %v198
      %v307 = vunpack.c.l.b16 %v199
      %v308 = vunpack.c.l.b16 %v200
      %v309 = vunpack.c.l.b16 %v201
      %v310 = vunpack.c.l.b16 %v202
      %v311 = vunpack.c.l.b16 %v203
      %v312 = vunpack.c.l.b16 %v204
      %v313 = vunpack.c.l.b16 %v205
      %v314 = vunpack.c.l.b16 %v206
      %v315 = vunpack.c.l.b16 %v207
      %v316 = vunpack.c.l.b16 %v208
      %v317 = vunpack.c.l.b16 %v209
      %v318 = vunpack.c.l.b16 %v210
      %v319 = vunpack.c.l.b16 %v211
      %v320 = vunpack.c.l.b16 %v212
      %v321 = vunpack.c.l.b16 %v213
      %v322 = vunpack.c.l.b16 %v214
      %v323 = vunpack.c.l.b16 %v215
      %v324 = vunpack.c.l.b16 %v216
      %v325 = vpack.c.b16 %v294, %v293
      %v326 = vpack.c.b16 %v296, %v295
      %v327 = vpack.c.b16 %v298, %v297
      %v328 = vpack.c.b16 %v300, %v299
      %v329 = vpack.c.b16 %v302, %v301
      %v330 = vpack.c.b16 %v304, %v303
      %v331 = vpack.c.b16 %v306, %v305
      %v332 = vpack.c.b16 %v308, %v307
      %v333 = vpack.c.b16 %v310, %v309
      %v334 = vpack.c.b16 %v312, %v311
      %v335 = vpack.c.b16 %v314, %v313
      %v336 = vpack.c.b16 %v316, %v315
      %v337 = vpack.c.b16 %v318, %v317
      %v338 = vpack.c.b16 %v320, %v319
      %v339 = vpack.c.b16 %v322, %v321
      %v340 = vpack.c.b16 %v324, %v323
      %357 = vmatpush.bf16.msra.mxu0 %v332
      %358 = vmatpush.bf16.msra.mxu0 %v331
      %359 = vmatpush.bf16.msra.mxu0 %v330
      %360 = vmatpush.bf16.msra.mxu0 %v329
      %361 = vmatpush.bf16.msra.mxu0 %v328
      %362 = vmatpush.bf16.msra.mxu0 %v327
      %363 = vmatpush.bf16.msra.mxu0 %v326
      %364 = vmatpush.bf16.msra.mxu0 %v325
      %365 = vmatmul.bf16.gmra.mxu0 %v245
      %v366 = vpop.f32.mrf.mxu0
      %v367 = vadd.f32 %v219, %v366
      %v368 = vpop.f32.mrf.mxu0
      %v369 = vadd.f32 %v219, %v368
      %370 = vmatmul.bf16.gmra.mxu0 %v247
      %v371 = vpop.f32.mrf.mxu0
      %v372 = vadd.f32 %v219, %v371
      %v373 = vpop.f32.mrf.mxu0
      %v374 = vadd.f32 %v219, %v373
      %375 = vmatmul.bf16.gmra.mxu0 %v249
      %v376 = vpop.f32.mrf.mxu0
      %v377 = vadd.f32 %v219, %v376
      %v378 = vpop.f32.mrf.mxu0
      %v379 = vadd.f32 %v219, %v378
      %380 = vmatmul.bf16.gmra.mxu0 %v251
      %v381 = vpop.f32.mrf.mxu0
      %v382 = vadd.f32 %v219, %v381
      %v383 = vpop.f32.mrf.mxu0
      %v384 = vadd.f32 %v219, %v383
      %385 = vdwg.mxu0
      %386 = vmatpush.bf16.msra.mxu0 %v340
      %387 = vmatpush.bf16.msra.mxu0 %v339
      %388 = vmatpush.bf16.msra.mxu0 %v338
      %389 = vmatpush.bf16.msra.mxu0 %v337
      %390 = vmatpush.bf16.msra.mxu0 %v336
      %391 = vmatpush.bf16.msra.mxu0 %v335
      %392 = vmatpush.bf16.msra.mxu0 %v334
      %393 = vmatpush.bf16.msra.mxu0 %v333
      %394 = vmatmul.bf16.gmra.mxu0 %v246
      %v395 = vpop.f32.mrf.mxu0
      %v396 = vadd.f32 %v367, %v395
      %v397 = vpop.f32.mrf.mxu0
      %v398 = vadd.f32 %v369, %v397
      %399 = vmatmul.bf16.gmra.mxu0 %v248
      %v400 = vpop.f32.mrf.mxu0
      %v401 = vadd.f32 %v372, %v400
      %v402 = vpop.f32.mrf.mxu0
      %v403 = vadd.f32 %v374, %v402
      %404 = vmatmul.bf16.gmra.mxu0 %v250
      %v405 = vpop.f32.mrf.mxu0
      %v406 = vadd.f32 %v377, %v405
      %v407 = vpop.f32.mrf.mxu0
      %v408 = vadd.f32 %v379, %v407
      %409 = vmatmul.bf16.gmra.mxu0 %v252
      %v410 = vpop.f32.mrf.mxu0
      %v411 = vadd.f32 %v382, %v410
      %v412 = vpop.f32.mrf.mxu0
      %v413 = vadd.f32 %v384, %v412
      %414 = vdwg.mxu0
      %vm415 = vcmp.gt.f32.partialorder %v396, 0.0
      %vm416 = vcmp.gt.f32.partialorder %v398, 0.0
      %vm417 = vcmp.gt.f32.partialorder %v401, 0.0
      %vm418 = vcmp.gt.f32.partialorder %v403, 0.0
      %vm419 = vcmp.gt.f32.partialorder %v406, 0.0
      %vm420 = vcmp.gt.f32.partialorder %v408, 0.0
      %vm421 = vcmp.gt.f32.partialorder %v411, 0.0
      %vm422 = vcmp.gt.f32.partialorder %v413, 0.0
      %v423 = vmul.f32 %v396, 0.2
      %v424 = vmul.f32 %v398, 0.2
      %v425 = vmul.f32 %v401, 0.2
      %v426 = vmul.f32 %v403, 0.2
      %v427 = vmul.f32 %v406, 0.2
      %v428 = vmul.f32 %v408, 0.2
      %v429 = vmul.f32 %v411, 0.2
      %v430 = vmul.f32 %v413, 0.2
      %v431 = vsel %vm415, %v396, %v423
      %v432 = vsel %vm416, %v398, %v424
      %v433 = vsel %vm417, %v401, %v425
      %v434 = vsel %vm418, %v403, %v426
      %v435 = vsel %vm419, %v406, %v427
      %v436 = vsel %vm420, %v408, %v428
      %v437 = vsel %vm421, %v411, %v429
      %v438 = vsel %vm422, %v413, %v430
      %v439 = vpack.c.bf16 %v431, %v431
      %v440 = vpack.c.bf16 %v432, %v432
      %v441 = vpack.c.bf16 %v433, %v433
      %v442 = vpack.c.bf16 %v434, %v434
      %v443 = vpack.c.bf16 %v435, %v435
      %v444 = vpack.c.bf16 %v436, %v436
      %v445 = vpack.c.bf16 %v437, %v437
      %v446 = vpack.c.bf16 %v438, %v438
      %447 = vst [vmem:[%s175] sm:$0xf] %v439
      %448 = vst [vmem:[%s175 + $0x4] sm:$0xf] %v440
      %449 = vst [vmem:[%s175 + $0x8] sm:$0xf] %v441
      %450 = vst [vmem:[%s175 + $0xc] sm:$0xf] %v442
      %451 = vst [vmem:[%s175 + $0x10] sm:$0xf] %v443
      %452 = vst [vmem:[%s175 + $0x14] sm:$0xf] %v444
      %453 = vst [vmem:[%s175 + $0x18] sm:$0xf] %v445
      %454 = vst [vmem:[%s175 + $0x1c] sm:$0xf] %v446
      %s455 = smul.u32 8, %s14
      %p456 = scmp.lt.s32.totalorder %s455, 15
      %s457 = scalar_select %p456, %s455, 15
      %s458 = smul.addr %s457, 4
      %s459 = scalar_lea.vmem %s3, %s458
      // Predicated region
      $region33: #{discriminator_forward.5} parent=31 // pred_check
        %p460 = pneg %p100
      $region34: #{discriminator_forward.5} parent=31 // pred_check_branch
        %462 = sbr.rel (%p460) target = $region36
      $region35: #{discriminator_forward.5} parent=31 // pred_region
        %s463 = smul.u32 8, %s14
      $region36: #{discriminator_forward.5} parent=31 // pred_fallthru
        _
    $region32: #{discriminator_forward.5} parent=5 // pred_fallthru
      _
    %p464 = scmp.le.s32.totalorder 2, %s9
    // Predicated region
    $region37: #{discriminator_forward.5} parent=5 // pred_check
      %p465 = pneg %p464
    $region38: #{discriminator_forward.5} parent=5 // pred_check_branch
      %467 = sbr.rel (%p465) target = $region40
    $region39: #{discriminator_forward.5} parent=5 // pred_region
      %s468 = ssub.s32 %s9, 2
      // Predicated region
      $region41: #{discriminator_forward.5} parent=39 // pred_check
        %p469 = pneg %p106
      $region42: #{discriminator_forward.5} parent=39 // pred_check_branch
        %471 = sbr.rel (%p469) target = $region44
      $region43: #{discriminator_forward.5} parent=39 // pred_region
        %s472 = smul.u32 8, %s15
        %p473 = scmp.lt.s32.totalorder %s472, 15
        %s474 = scalar_select %p473, %s472, 15
        %s475 = smul.addr %s474, 4
        %s476 = scalar_lea.vmem %s3, %s475
      $region44: #{discriminator_forward.5} parent=39 // pred_fallthru
        _
    $region40: #{discriminator_forward.5} parent=5 // pred_fallthru
      _
  $region6: #{discriminator_forward.5} parent=0 // loop_footer
    %s13 = sadd.s32 1, %s9
  $region7: #{discriminator_forward.5} parent=0 // loop_footer_branch
    %8 = sbr.rel target = $region3
  $region8: #{discriminator_forward.5} parent=0 // loop_exit
    _

// kernel: discriminator_forward.6
$region0: #{discriminator_forward.6}
  #allocation0 [shape = 'u32[]', space=smem, size = 0x4, offset = 0x4, fixed_abs, tag = 'smem constant byte address 0x4 - core index']
  #allocation1 [shape = 'u32[72,128]{1,0:T(1,128)}', space=vmem, size = 0x9000, scoped, tag = 'internal scratch']
  %s0 = inlined_call_operand.vmem [shape: bf16[32,512], index: 0, kind: input, shape index: {}]
  %s1 = inlined_call_operand.vmem [shape: bf16[512,128], index: 1, kind: input, shape index: {}]
  %s2 = inlined_call_operand.vmem [shape: f32[1,128], index: 2, kind: input, shape index: {}]
  %s3 = inlined_call_operand.vmem [shape: bf16[32,128], index: 3, kind: output, shape index: {}]
  %s4 = sld [smem:[#allocation0]]
  $region22: #{discriminator_forward.6} parent=0
    _
  %s6 = ssub.s32 1, %s4
  %s7 = scalar_select 0, %s6, %s4
  // Predicated region
  $region2: #{discriminator_forward.6} parent=0 // pred_check
    _
  $region3: #{discriminator_forward.6} parent=0 // pred_check_branch
    %9 = sbr.rel (0) target = $region5
  $region4: #{discriminator_forward.6} parent=0 // pred_region
    _
  $region5: #{discriminator_forward.6} parent=0 // pred_fallthru
    _
  // Predicated region
  $region6: #{discriminator_forward.6} parent=0 // pred_check
    _
  $region7: #{discriminator_forward.6} parent=0 // pred_check_branch
    %11 = sbr.rel (0) target = $region9
  $region8: #{discriminator_forward.6} parent=0 // pred_region
    _
  $region9: #{discriminator_forward.6} parent=0 // pred_fallthru
    _
  // Predicated region
  $region10: #{discriminator_forward.6} parent=0 // pred_check
    _
  $region11: #{discriminator_forward.6} parent=0 // pred_check_branch
    %13 = sbr.rel (0) target = $region13
  $region12: #{discriminator_forward.6} parent=0 // pred_region
    _
  $region13: #{discriminator_forward.6} parent=0 // pred_fallthru
    _
  %v14 = vld [vmem:[%s0] sm:$0xff]
  %v15 = vld [vmem:[%s0 + $0x8] sm:$0xff]
  %v16 = vld [vmem:[%s0 + $0x10] sm:$0xff]
  %v17 = vld [vmem:[%s0 + $0x18] sm:$0xff]
  %v18 = vld [vmem:[%s0 + $0x20] sm:$0xff]
  %v19 = vld [vmem:[%s0 + $0x28] sm:$0xff]
  %v20 = vld [vmem:[%s0 + $0x30] sm:$0xff]
  %v21 = vld [vmem:[%s0 + $0x38] sm:$0xff]
  %v22 = vld [vmem:[%s1] sm:$0xf]
  %v23 = vld [vmem:[%s1 + $0x4] sm:$0xf]
  %v24 = vld [vmem:[%s1 + $0x8] sm:$0xf]
  %v25 = vld [vmem:[%s1 + $0xc] sm:$0xf]
  %v26 = vld [vmem:[%s1 + $0x10] sm:$0xf]
  %v27 = vld [vmem:[%s1 + $0x14] sm:$0xf]
  %v28 = vld [vmem:[%s1 + $0x18] sm:$0xf]
  %v29 = vld [vmem:[%s1 + $0x1c] sm:$0xf]
  %v30 = vld [vmem:[%s1 + $0x20] sm:$0xf]
  %v31 = vld [vmem:[%s1 + $0x24] sm:$0xf]
  %v32 = vld [vmem:[%s1 + $0x28] sm:$0xf]
  %v33 = vld [vmem:[%s1 + $0x2c] sm:$0xf]
  %v34 = vld [vmem:[%s1 + $0x30] sm:$0xf]
  %v35 = vld [vmem:[%s1 + $0x34] sm:$0xf]
  %v36 = vld [vmem:[%s1 + $0x38] sm:$0xf]
  %v37 = vld [vmem:[%s1 + $0x3c] sm:$0xf]
  %v38 = vld [vmem:[%s1 + $0x40] sm:$0xf]
  %v39 = vld [vmem:[%s1 + $0x44] sm:$0xf]
  %v40 = vld [vmem:[%s1 + $0x48] sm:$0xf]
  %v41 = vld [vmem:[%s1 + $0x4c] sm:$0xf]
  %v42 = vld [vmem:[%s1 + $0x50] sm:$0xf]
  %v43 = vld [vmem:[%s1 + $0x54] sm:$0xf]
  %v44 = vld [vmem:[%s1 + $0x58] sm:$0xf]
  %v45 = vld [vmem:[%s1 + $0x5c] sm:$0xf]
  %v46 = vld [vmem:[%s1 + $0x60] sm:$0xf]
  %v47 = vld [vmem:[%s1 + $0x64] sm:$0xf]
  %v48 = vld [vmem:[%s1 + $0x68] sm:$0xf]
  %v49 = vld [vmem:[%s1 + $0x6c] sm:$0xf]
  %v50 = vld [vmem:[%s1 + $0x70] sm:$0xf]
  %v51 = vld [vmem:[%s1 + $0x74] sm:$0xf]
  %v52 = vld [vmem:[%s1 + $0x78] sm:$0xf]
  %v53 = vld [vmem:[%s1 + $0x7c] sm:$0xf]
  %v54 = vld [vmem:[%s1 + $0x80] sm:$0xf]
  %v55 = vld [vmem:[%s1 + $0x84] sm:$0xf]
  %v56 = vld [vmem:[%s1 + $0x88] sm:$0xf]
  %v57 = vld [vmem:[%s1 + $0x8c] sm:$0xf]
  %v58 = vld [vmem:[%s1 + $0x90] sm:$0xf]
  %v59 = vld [vmem:[%s1 + $0x94] sm:$0xf]
  %v60 = vld [vmem:[%s1 + $0x98] sm:$0xf]
  %v61 = vld [vmem:[%s1 + $0x9c] sm:$0xf]
  %v62 = vld [vmem:[%s1 + $0xa0] sm:$0xf]
  %v63 = vld [vmem:[%s1 + $0xa4] sm:$0xf]
  %v64 = vld [vmem:[%s1 + $0xa8] sm:$0xf]
  %v65 = vld [vmem:[%s1 + $0xac] sm:$0xf]
  %v66 = vld [vmem:[%s1 + $0xb0] sm:$0xf]
  %v67 = vld [vmem:[%s1 + $0xb4] sm:$0xf]
  %v68 = vld [vmem:[%s1 + $0xb8] sm:$0xf]
  %v69 = vld [vmem:[%s1 + $0xbc] sm:$0xf]
  %v70 = vld [vmem:[%s1 + $0xc0] sm:$0xf]
  %v71 = vld [vmem:[%s1 + $0xc4] sm:$0xf]
  %v72 = vld [vmem:[%s1 + $0xc8] sm:$0xf]
  %v73 = vld [vmem:[%s1 + $0xcc] sm:$0xf]
  %v74 = vld [vmem:[%s1 + $0xd0] sm:$0xf]
  %v75 = vld [vmem:[%s1 + $0xd4] sm:$0xf]
  %v76 = vld [vmem:[%s1 + $0xd8] sm:$0xf]
  %v77 = vld [vmem:[%s1 + $0xdc] sm:$0xf]
  %v78 = vld [vmem:[%s1 + $0xe0] sm:$0xf]
  %v79 = vld [vmem:[%s1 + $0xe4] sm:$0xf]
  %v80 = vld [vmem:[%s1 + $0xe8] sm:$0xf]
  %v81 = vld [vmem:[%s1 + $0xec] sm:$0xf]
  %v82 = vld [vmem:[%s1 + $0xf0] sm:$0xf]
  %v83 = vld [vmem:[%s1 + $0xf4] sm:$0xf]
  %v84 = vld [vmem:[%s1 + $0xf8] sm:$0xf]
  %v85 = vld [vmem:[%s1 + $0xfc] sm:$0xf]
  %v86 = vld [vmem:[%s2] sm:$0x1]
  %v88 = vperm.slane %v86, 0
  %v98 = vunpack.c.l.b16 %v14
  %v99 = vunpack.c.h.b16 %v14
  %v100 = vunpack.c.l.b16 %v15
  %v101 = vunpack.c.h.b16 %v15
  %v102 = vunpack.c.l.b16 %v16
  %v103 = vunpack.c.h.b16 %v16
  %v104 = vunpack.c.l.b16 %v17
  %v105 = vunpack.c.h.b16 %v17
  %v106 = vunpack.c.l.b16 %v18
  %v107 = vunpack.c.h.b16 %v18
  %v108 = vunpack.c.l.b16 %v19
  %v109 = vunpack.c.h.b16 %v19
  %v110 = vunpack.c.l.b16 %v20
  %v111 = vunpack.c.h.b16 %v20
  %v112 = vunpack.c.l.b16 %v21
  %v113 = vunpack.c.h.b16 %v21
  %v114 = vpack.c.b16 %v102, %v98
  %v115 = vpack.c.b16 %v103, %v99
  %v116 = vpack.c.b16 %v104, %v100
  %v117 = vpack.c.b16 %v105, %v101
  %v118 = vpack.c.b16 %v110, %v106
  %v119 = vpack.c.b16 %v111, %v107
  %v120 = vpack.c.b16 %v112, %v108
  %v121 = vpack.c.b16 %v113, %v109
  %v194 = vunpack.c.l.b16 %v22
  %v195 = vunpack.c.l.b16 %v23
  %v196 = vunpack.c.l.b16 %v24
  %v197 = vunpack.c.l.b16 %v25
  %v198 = vunpack.c.l.b16 %v26
  %v199 = vunpack.c.l.b16 %v27
  %v200 = vunpack.c.l.b16 %v28
  %v201 = vunpack.c.l.b16 %v29
  %v202 = vunpack.c.l.b16 %v30
  %v203 = vunpack.c.l.b16 %v31
  %v204 = vunpack.c.l.b16 %v32
  %v205 = vunpack.c.l.b16 %v33
  %v206 = vunpack.c.l.b16 %v34
  %v207 = vunpack.c.l.b16 %v35
  %v208 = vunpack.c.l.b16 %v36
  %v209 = vunpack.c.l.b16 %v37
  %v210 = vunpack.c.l.b16 %v38
  %v211 = vunpack.c.l.b16 %v39
  %v212 = vunpack.c.l.b16 %v40
  %v213 = vunpack.c.l.b16 %v41
  %v214 = vunpack.c.l.b16 %v42
  %v215 = vunpack.c.l.b16 %v43
  %v216 = vunpack.c.l.b16 %v44
  %v217 = vunpack.c.l.b16 %v45
  %v218 = vunpack.c.l.b16 %v46
  %v219 = vunpack.c.l.b16 %v47
  %v220 = vunpack.c.l.b16 %v48
  %v221 = vunpack.c.l.b16 %v49
  %v222 = vunpack.c.l.b16 %v50
  %v223 = vunpack.c.l.b16 %v51
  %v224 = vunpack.c.l.b16 %v52
  %v225 = vunpack.c.l.b16 %v53
  %v226 = vunpack.c.l.b16 %v54
  %v227 = vunpack.c.l.b16 %v55
  %v228 = vunpack.c.l.b16 %v56
  %v229 = vunpack.c.l.b16 %v57
  %v230 = vunpack.c.l.b16 %v58
  %v231 = vunpack.c.l.b16 %v59
  %v232 = vunpack.c.l.b16 %v60
  %v233 = vunpack.c.l.b16 %v61
  %v234 = vunpack.c.l.b16 %v62
  %v235 = vunpack.c.l.b16 %v63
  %v236 = vunpack.c.l.b16 %v64
  %v237 = vunpack.c.l.b16 %v65
  %v238 = vunpack.c.l.b16 %v66
  %v239 = vunpack.c.l.b16 %v67
  %v240 = vunpack.c.l.b16 %v68
  %v241 = vunpack.c.l.b16 %v69
  %v242 = vunpack.c.l.b16 %v70
  %v243 = vunpack.c.l.b16 %v71
  %v244 = vunpack.c.l.b16 %v72
  %v245 = vunpack.c.l.b16 %v73
  %v246 = vunpack.c.l.b16 %v74
  %v247 = vunpack.c.l.b16 %v75
  %v248 = vunpack.c.l.b16 %v76
  %v249 = vunpack.c.l.b16 %v77
  %v250 = vunpack.c.l.b16 %v78
  %v251 = vunpack.c.l.b16 %v79
  %v252 = vunpack.c.l.b16 %v80
  %v253 = vunpack.c.l.b16 %v81
  %v254 = vunpack.c.l.b16 %v82
  %v255 = vunpack.c.l.b16 %v83
  %v256 = vunpack.c.l.b16 %v84
  %v257 = vunpack.c.l.b16 %v85
  %v258 = vpack.c.b16 %v195, %v194
  %v259 = vpack.c.b16 %v197, %v196
  %v260 = vpack.c.b16 %v199, %v198
  %v261 = vpack.c.b16 %v201, %v200
  %v262 = vpack.c.b16 %v203, %v202
  %v263 = vpack.c.b16 %v205, %v204
  %v264 = vpack.c.b16 %v207, %v206
  %v265 = vpack.c.b16 %v209, %v208
  %v266 = vpack.c.b16 %v211, %v210
  %v267 = vpack.c.b16 %v213, %v212
  %v268 = vpack.c.b16 %v215, %v214
  %v269 = vpack.c.b16 %v217, %v216
  %v270 = vpack.c.b16 %v219, %v218
  %v271 = vpack.c.b16 %v221, %v220
  %v272 = vpack.c.b16 %v223, %v222
  %v273 = vpack.c.b16 %v225, %v224
  %v274 = vpack.c.b16 %v227, %v226
  %v275 = vpack.c.b16 %v229, %v228
  %v276 = vpack.c.b16 %v231, %v230
  %v277 = vpack.c.b16 %v233, %v232
  %v278 = vpack.c.b16 %v235, %v234
  %v279 = vpack.c.b16 %v237, %v236
  %v280 = vpack.c.b16 %v239, %v238
  %v281 = vpack.c.b16 %v241, %v240
  %v282 = vpack.c.b16 %v243, %v242
  %v283 = vpack.c.b16 %v245, %v244
  %v284 = vpack.c.b16 %v247, %v246
  %v285 = vpack.c.b16 %v249, %v248
  %v286 = vpack.c.b16 %v251, %v250
  %v287 = vpack.c.b16 %v253, %v252
  %v288 = vpack.c.b16 %v255, %v254
  %v289 = vpack.c.b16 %v257, %v256
  %322 = vmatpush.bf16.msra.mxu0 %v265
  %323 = vmatpush.bf16.msra.mxu0 %v264
  %324 = vmatpush.bf16.msra.mxu0 %v263
  %325 = vmatpush.bf16.msra.mxu0 %v262
  %326 = vmatpush.bf16.msra.mxu0 %v261
  %327 = vmatpush.bf16.msra.mxu0 %v260
  %328 = vmatpush.bf16.msra.mxu0 %v259
  %329 = vmatpush.bf16.msra.mxu0 %v258
  %330 = vmatmul.bf16.gmra.mxu0 %v114
  %v331 = vpop.f32.mrf.mxu0
  %v332 = vadd.f32 %v88, %v331
  %v333 = vpop.f32.mrf.mxu0
  %v334 = vadd.f32 %v88, %v333
  %335 = vmatmul.bf16.gmra.mxu0 %v118
  %v336 = vpop.f32.mrf.mxu0
  %v337 = vadd.f32 %v88, %v336
  %v338 = vpop.f32.mrf.mxu0
  %v339 = vadd.f32 %v88, %v338
  %340 = vdwg.mxu0
  %341 = vmatpush.bf16.msra.mxu0 %v273
  %342 = vmatpush.bf16.msra.mxu0 %v272
  %343 = vmatpush.bf16.msra.mxu0 %v271
  %344 = vmatpush.bf16.msra.mxu0 %v270
  %345 = vmatpush.bf16.msra.mxu0 %v269
  %346 = vmatpush.bf16.msra.mxu0 %v268
  %347 = vmatpush.bf16.msra.mxu0 %v267
  %348 = vmatpush.bf16.msra.mxu0 %v266
  %349 = vmatmul.bf16.gmra.mxu0 %v115
  %v350 = vpop.f32.mrf.mxu0
  %v351 = vadd.f32 %v332, %v350
  %v352 = vpop.f32.mrf.mxu0
  %v353 = vadd.f32 %v334, %v352
  %354 = vmatmul.bf16.gmra.mxu0 %v119
  %v355 = vpop.f32.mrf.mxu0
  %v356 = vadd.f32 %v337, %v355
  %v357 = vpop.f32.mrf.mxu0
  %v358 = vadd.f32 %v339, %v357
  %359 = vdwg.mxu0
  %360 = vmatpush.bf16.msra.mxu0 %v281
  %361 = vmatpush.bf16.msra.mxu0 %v280
  %362 = vmatpush.bf16.msra.mxu0 %v279
  %363 = vmatpush.bf16.msra.mxu0 %v278
  %364 = vmatpush.bf16.msra.mxu0 %v277
  %365 = vmatpush.bf16.msra.mxu0 %v276
  %366 = vmatpush.bf16.msra.mxu0 %v275
  %367 = vmatpush.bf16.msra.mxu0 %v274
  %368 = vmatmul.bf16.gmra.mxu0 %v116
  %v369 = vpop.f32.mrf.mxu0
  %v370 = vadd.f32 %v351, %v369
  %v371 = vpop.f32.mrf.mxu0
  %v372 = vadd.f32 %v353, %v371
  %373 = vmatmul.bf16.gmra.mxu0 %v120
  %v374 = vpop.f32.mrf.mxu0
  %v375 = vadd.f32 %v356, %v374
  %v376 = vpop.f32.mrf.mxu0
  %v377 = vadd.f32 %v358, %v376
  %378 = vdwg.mxu0
  %379 = vmatpush.bf16.msra.mxu0 %v289
  %380 = vmatpush.bf16.msra.mxu0 %v288
  %381 = vmatpush.bf16.msra.mxu0 %v287
  %382 = vmatpush.bf16.msra.mxu0 %v286
  %383 = vmatpush.bf16.msra.mxu0 %v285
  %384 = vmatpush.bf16.msra.mxu0 %v284
  %385 = vmatpush.bf16.msra.mxu0 %v283
  %386 = vmatpush.bf16.msra.mxu0 %v282
  %387 = vmatmul.bf16.gmra.mxu0 %v117
  %v388 = vpop.f32.mrf.mxu0
  %v389 = vadd.f32 %v370, %v388
  %v390 = vpop.f32.mrf.mxu0
  %v391 = vadd.f32 %v372, %v390
  %392 = vmatmul.bf16.gmra.mxu0 %v121
  %v393 = vpop.f32.mrf.mxu0
  %v394 = vadd.f32 %v375, %v393
  %v395 = vpop.f32.mrf.mxu0
  %v396 = vadd.f32 %v377, %v395
  %397 = vdwg.mxu0
  %vm398 = vcmp.gt.f32.partialorder %v389, 0.0
  %vm399 = vcmp.gt.f32.partialorder %v391, 0.0
  %vm400 = vcmp.gt.f32.partialorder %v394, 0.0
  %vm401 = vcmp.gt.f32.partialorder %v396, 0.0
  %v402 = vmul.f32 %v389, 0.2
  %v403 = vmul.f32 %v391, 0.2
  %v404 = vmul.f32 %v394, 0.2
  %v405 = vmul.f32 %v396, 0.2
  %v406 = vsel %vm398, %v389, %v402
  %v407 = vsel %vm399, %v391, %v403
  %v408 = vsel %vm400, %v394, %v404
  %v409 = vsel %vm401, %v396, %v405
  %v410 = vpack.c.bf16 %v406, %v406
  %v411 = vpack.c.bf16 %v407, %v407
  %v412 = vpack.c.bf16 %v408, %v408
  %v413 = vpack.c.bf16 %v409, %v409
  %414 = vst [vmem:[%s3] sm:$0xf] %v410
  %415 = vst [vmem:[%s3 + $0x4] sm:$0xf] %v411
  %416 = vst [vmem:[%s3 + $0x8] sm:$0xf] %v412
  %417 = vst [vmem:[%s3 + $0xc] sm:$0xf] %v413
  // Predicated region
  $region14: #{discriminator_forward.6} parent=0 // pred_check
    _
  $region15: #{discriminator_forward.6} parent=0 // pred_check_branch
    %419 = sbr.rel (0) target = $region17
  $region16: #{discriminator_forward.6} parent=0 // pred_region
    _
  $region17: #{discriminator_forward.6} parent=0 // pred_fallthru
    _
  // Predicated region
  $region18: #{discriminator_forward.6} parent=0 // pred_check
    _
  $region19: #{discriminator_forward.6} parent=0 // pred_check_branch
    %421 = sbr.rel (0) target = $region21
  $region20: #{discriminator_forward.6} parent=0 // pred_region
    _
  $region21: #{discriminator_forward.6} parent=0 // pred_fallthru
    _

// kernel: discriminator_forward.7
$region0: #{discriminator_forward.7}
  #allocation0 [shape = 'u32[]', space=smem, size = 0x4, offset = 0x4, fixed_abs, tag = 'smem constant byte address 0x4 - core index']
  #allocation1 [shape = 'u32[72,128]{1,0:T(1,128)}', space=vmem, size = 0x9000, scoped, tag = 'internal scratch']
  %s0 = inlined_call_operand.vmem [shape: bf16[16,1024], index: 0, kind: input, shape index: {}]
  %s1 = inlined_call_operand.vmem [shape: bf16[1,1024], index: 1, kind: input, shape index: {}]
  %s2 = inlined_call_operand.vmem [shape: f32[16,1], index: 2, kind: output, shape index: {}]
  %s3 = sld [smem:[#allocation0]]
  $region18: #{discriminator_forward.7} parent=0
    _
  %s5 = ssub.s32 1, %s3
  %s6 = scalar_select 0, %s5, %s3
  // Predicated region
  $region2: #{discriminator_forward.7} parent=0 // pred_check
    _
  $region3: #{discriminator_forward.7} parent=0 // pred_check_branch
    %8 = sbr.rel (0) target = $region5
  $region4: #{discriminator_forward.7} parent=0 // pred_region
    _
  $region5: #{discriminator_forward.7} parent=0 // pred_fallthru
    _
  // Predicated region
  $region6: #{discriminator_forward.7} parent=0 // pred_check
    _
  $region7: #{discriminator_forward.7} parent=0 // pred_check_branch
    %10 = sbr.rel (0) target = $region9
  $region8: #{discriminator_forward.7} parent=0 // pred_region
    _
  $region9: #{discriminator_forward.7} parent=0 // pred_fallthru
    _
  %v11 = vld [vmem:[%s0] sm:$0xff]
  %v12 = vld [vmem:[%s0 + $0x8] sm:$0xff]
  %v13 = vld [vmem:[%s0 + $0x10] sm:$0xff]
  %v14 = vld [vmem:[%s0 + $0x18] sm:$0xff]
  %v15 = vld [vmem:[%s0 + $0x20] sm:$0xff]
  %v16 = vld [vmem:[%s0 + $0x28] sm:$0xff]
  %v17 = vld [vmem:[%s0 + $0x30] sm:$0xff]
  %v18 = vld [vmem:[%s0 + $0x38] sm:$0xff]
  %v19 = vunpack.c.l.bf16 %v11
  %v20 = vunpack.c.h.bf16 %v11
  %v21 = vunpack.c.l.bf16 %v12
  %v22 = vunpack.c.h.bf16 %v12
  %v23 = vunpack.c.l.bf16 %v13
  %v24 = vunpack.c.h.bf16 %v13
  %v25 = vunpack.c.l.bf16 %v14
  %v26 = vunpack.c.h.bf16 %v14
  %v27 = vunpack.c.l.bf16 %v15
  %v28 = vunpack.c.h.bf16 %v15
  %v29 = vunpack.c.l.bf16 %v16
  %v30 = vunpack.c.h.bf16 %v16
  %v31 = vunpack.c.l.bf16 %v17
  %v32 = vunpack.c.h.bf16 %v17
  %v33 = vunpack.c.l.bf16 %v18
  %v34 = vunpack.c.h.bf16 %v18
  %v35 = vld [vmem:[%s1] sm:$0xff]
  %v36 = vunpack.c.l.bf16 %v35
  %v37 = vunpack.c.h.bf16 %v35
  %v40 = vperm.slane %v36, 0
  %v41 = vperm.slane %v36, 2
  %v42 = vperm.slane %v36, 4
  %v43 = vperm.slane %v36, 6
  %v44 = vperm.slane %v37, 0
  %v45 = vperm.slane %v37, 2
  %v46 = vperm.slane %v37, 4
  %v47 = vperm.slane %v37, 6
  %v56 = vperm.slane %v40, 0
  %v57 = vperm.slane %v41, 0
  %v58 = vperm.slane %v42, 0
  %v59 = vperm.slane %v43, 0
  %v60 = vperm.slane %v44, 0
  %v61 = vperm.slane %v45, 0
  %v62 = vperm.slane %v46, 0
  %v63 = vperm.slane %v47, 0
  %v64 = vmul.f32 %v19, %v56
  %v65 = vmul.f32 %v20, %v57
  %v66 = vmul.f32 %v21, %v58
  %v67 = vmul.f32 %v22, %v59
  %v68 = vmul.f32 %v23, %v60
  %v69 = vmul.f32 %v24, %v61
  %v70 = vmul.f32 %v25, %v62
  %v71 = vmul.f32 %v26, %v63
  %v72 = vmul.f32 %v27, %v56
  %v73 = vmul.f32 %v28, %v57
  %v74 = vmul.f32 %v29, %v58
  %v75 = vmul.f32 %v30, %v59
  %v76 = vmul.f32 %v31, %v60
  %v77 = vmul.f32 %v32, %v61
  %v78 = vmul.f32 %v33, %v62
  %v79 = vmul.f32 %v34, %v63
  %v80 = vadd.f32 %v64, %v65
  %v81 = vadd.f32 %v80, %v66
  %v82 = vadd.f32 %v81, %v67
  %v83 = vadd.f32 %v82, %v68
  %v84 = vadd.f32 %v83, %v69
  %v85 = vadd.f32 %v84, %v70
  %v86 = vadd.f32 %v85, %v71
  %87 = vadd.xlane.f32.xlu0 %v86
  %v88 = vpop.xlane.xlu0 %87
  %v89 = vadd.f32 %v72, %v73
  %v90 = vadd.f32 %v89, %v74
  %v91 = vadd.f32 %v90, %v75
  %v92 = vadd.f32 %v91, %v76
  %v93 = vadd.f32 %v92, %v77
  %v94 = vadd.f32 %v93, %v78
  %v95 = vadd.f32 %v94, %v79
  %96 = vadd.xlane.f32.xlu0 %v95
  %v97 = vpop.xlane.xlu0 %96
  %vm98 = vcmask 7168
  %99 = vst.msk [vmem:[%s2] sm:$0xff] %vm98, %v88
  %100 = vst.msk [vmem:[%s2 + $0x8] sm:$0xff] %vm98, %v97
  // Predicated region
  $region10: #{discriminator_forward.7} parent=0 // pred_check
    _
  $region11: #{discriminator_forward.7} parent=0 // pred_check_branch
    %102 = sbr.rel (0) target = $region13
  $region12: #{discriminator_forward.7} parent=0 // pred_region
    _
  $region13: #{discriminator_forward.7} parent=0 // pred_fallthru
    _
  // Predicated region
  $region14: #{discriminator_forward.7} parent=0 // pred_check
    _
  $region15: #{discriminator_forward.7} parent=0 // pred_check_branch
    %104 = sbr.rel (0) target = $region17
  $region16: #{discriminator_forward.7} parent=0 // pred_region
    _
  $region17: #{discriminator_forward.7} parent=0 // pred_fallthru
    _

</llo_original>
